<compile_context>
chip_gen: v6e
topology: v6e:2x2x1
jax: 0.10.0
libtpu: 0.0.40
codegen_flags: <defaults>
</compile_context>

<pallas_src>
from functools import partial

import numpy as np
import jax
import jax.numpy as jnp
from jax import lax
from jax.experimental import pallas as pl
from jax.experimental.pallas import tpu as pltpu


def _make_kernel(T, B, C, M, H):
    """Kernel over one batch block of size B; T-1 recurrence steps, unrolled."""
    CM = C + M
    f32 = jnp.float32
    bf16 = jnp.bfloat16

    def kernel(seq_ref, w_ref, b_ref, out_ref):
        # ---- hoisted weight / bias loads (all slices start at offset 0) ----
        w0 = w_ref[0, : CM + H, :H]        # (CM+H, H) bf16  [w_ih0 ; w_hh0]
        w1 = w_ref[1, : 2 * H, :H]         # (2H,   H) bf16  [w_ih1 ; w_hh1]
        wh = w_ref[2, :H, :CM]             # (H,   CM) bf16  [w_cat | w_val]
        b0 = jnp.broadcast_to(b_ref[0, :, :H], (B, H))     # folded b_ih0+b_hh0
        b1 = jnp.broadcast_to(b_ref[1, :, :H], (B, H))     # folded b_ih1+b_hh1
        bh = jnp.broadcast_to(b_ref[2, :, :CM], (B, CM))   # [b_cat | b_val]

        # Lane masks: first C lanes = categorical logits, last M = measures.
        lane = lax.broadcasted_iota(jnp.int32, (B, CM), 1)
        cat_mask = lane < C
        add_mask = jnp.where(cat_mask, 0.0, -jnp.inf).astype(f32)  # softmax mask

        # Step-0 inputs (fully observed, per the reference); zero hidden state.
        x = seq_ref[0]                      # (B, CM) f32 packed [cat | val]
        h0 = jnp.zeros((B, H), f32)
        h1 = jnp.zeros((B, H), f32)

        # Fully unrolled at trace time: T is small & static, so every
        # out_ref[t] / seq_ref[t+1] index is static.
        for t in range(T - 1):
            # layer 0: tanh([x | h0] @ W0 + b0)   -- one MXU push
            xh0 = jnp.concatenate([x, h0], axis=-1).astype(bf16)
            h0 = jnp.tanh(jnp.dot(xh0, w0, preferred_element_type=f32) + b0)
            # layer 1: tanh([h0 | h1] @ W1 + b1)  -- one MXU push
            xh1 = jnp.concatenate([h0, h1], axis=-1).astype(bf16)
            h1 = jnp.tanh(jnp.dot(xh1, w1, preferred_element_type=f32) + b1)

            # fused heads: [hid2category | hid2measures] in one matmul
            head = jnp.dot(h1.astype(bf16), wh, preferred_element_type=f32) + bh

            # softmax over the C categorical lanes (additive -inf mask);
            # +i_val residual on the M measurement lanes.
            masked = head + add_mask
            mx = jnp.max(masked, axis=-1, keepdims=True)
            e = jnp.exp(masked - mx)                     # exp(-inf)=0 on val lanes
            s = jnp.sum(e, axis=-1, keepdims=True)
            o = jnp.where(cat_mask,
                          e * pl.reciprocal(s),          # exact: o is fed back
                          head + x)                      # val lanes: head + i_val

            # single lane-dense store per step: [o_cat | o_val | h1]
            out_ref[t] = jnp.concatenate([o, h1], axis=-1)

            # impute NaNs of the NEXT time step with the model prediction
            nxt = seq_ref[t + 1]
            x = jnp.where(jnp.isnan(nxt), o, nxt)

    return kernel


def pack_params(params):
    """Host-side, once-per-model parameter packing (hoisted out of forward)."""
    f32 = jnp.float32
    H = params["w_hh0"].shape[0]
    C = params["w_cat"].shape[0]
    M = params["w_val"].shape[0]
    CM = C + M
    Wc = max(H, CM)
    Rmax = max(CM + H, 2 * H)

    def t_(k):  # PyTorch (out, in) -> (in, out) so the kernel computes x @ W
        return jnp.asarray(params[k], f32).T

    w0 = jnp.concatenate([t_("w_ih0"), t_("w_hh0")], axis=0)   # (CM+H, H)
    w1 = jnp.concatenate([t_("w_ih1"), t_("w_hh1")], axis=0)   # (2H,   H)
    wh = jnp.concatenate([t_("w_cat"), t_("w_val")], axis=1)   # (H,   CM)

    def padw(w):
        return jnp.pad(w, ((0, Rmax - w.shape[0]), (0, Wc - w.shape[1])))

    w_blob = jnp.stack([padw(w0), padw(w1), padw(wh)]).astype(jnp.bfloat16)

    b0 = jnp.asarray(params["b_ih0"], f32) + jnp.asarray(params["b_hh0"], f32)
    b1 = jnp.asarray(params["b_ih1"], f32) + jnp.asarray(params["b_hh1"], f32)
    bh = jnp.concatenate([jnp.asarray(params["b_cat"], f32),
                          jnp.asarray(params["b_val"], f32)])

    def padb(b):
        return jnp.pad(b, (0, Wc - b.shape[0])).reshape(1, Wc)

    b_blob = jnp.stack([padb(b0), padb(b1), padb(bh)])          # (3, 1, Wc) f32

    return dict(w_blob=w_blob, b_blob=b_blob, C=C, M=M, H=H)


@partial(jax.jit, static_argnames=("C", "M", "H", "batch_block"))
def rnn_forward_all(cat_seq, val_seq, w_blob, b_blob, *, C, M, H,
                    batch_block=None):
    """Returns (o_cat, o_val, hidden_batch) from ONE pallas_call."""
    f32 = jnp.float32
    T, B, _ = cat_seq.shape
    CM = C + M

    # Pack [cat | val] once -> a single sequence stream (fused by XLA under jit).
    seq = jnp.concatenate([cat_seq.astype(f32), val_seq.astype(f32)], axis=-1)

    bb = B if batch_block is None else int(batch_block)
    assert B % bb == 0 and (bb == B or bb % 8 == 0), "batch_block must tile B"
    Rmax, Wc = w_blob.shape[1], w_blob.shape[2]

    kernel = _make_kernel(T, bb, C, M, H)
    grid_spec = pltpu.PrefetchScalarGridSpec(
        num_scalar_prefetch=0,
        grid=(B // bb,),                       # parallel over batch blocks
        in_specs=[
            pl.BlockSpec((T, bb, CM), lambda i: (0, i, 0)),
            pl.BlockSpec((3, Rmax, Wc), lambda i: (0, 0, 0)),
            pl.BlockSpec((3, 1, Wc), lambda i: (0, 0, 0)),
        ],
        out_specs=pl.BlockSpec((T - 1, bb, CM + H), lambda i: (0, i, 0)),
    )
    # NOTE: at demo size everything is a few 10s of KiB; when scaling B, keep
    # per-block residency well under the scoped VMEM default (32 MiB) or raise
    # vmem_limit_bytes in pltpu.CompilerParams (v7x has only 64 MiB physical).
    out = pl.pallas_call(
        kernel,
        out_shape=jax.ShapeDtypeStruct((T - 1, B, CM + H), f32),
        grid_spec=grid_spec,
        compiler_params=pltpu.CompilerParams(
            dimension_semantics=("parallel",)),
    )(seq, w_blob, b_blob)

    return out[..., :C], out[..., C:CM], out[..., CM:]


def rnn_model_interp_forward(cat_seq, val_seq, packed, latent=False,
                             batch_block=None):
    """Module-style API; single kernel run regardless of `latent`."""
    o_cat, o_val, hid = rnn_forward_all(
        cat_seq, val_seq, packed["w_blob"], packed["b_blob"],
        C=packed["C"], M=packed["M"], H=packed["H"], batch_block=batch_block)
    if latent:
        return hid
    return o_cat, o_val


def _ref_forward_numpy(cat_seq, val_seq, params):
    """Pure NumPy mirror of the PyTorch forward (eval mode) for verification."""
    cat = np.array(cat_seq, dtype=np.float32).copy()
    val = np.array(val_seq, dtype=np.float32).copy()
    T, B, C = cat.shape
    M = val.shape[2]
    H = params["w_hh0"].shape[0]
    p = {k: np.asarray(v, np.float32) for k, v in params.items()}
    h = [np.zeros((B, H), np.float32), np.zeros((B, H), np.float32)]
    i_mask = np.ones((B, M), np.float32)
    r_mask = [np.ones((B, H), np.float32), np.ones((B, H), np.float32)]

    def softmax(x):
        e = np.exp(x - x.max(-1, keepdims=True))
        return e / e.sum(-1, keepdims=True)

    out_cat, out_val, hid_batch = [], [], []
    for i in range(T - 1):
        x = np.concatenate([cat[i], val[i] * i_mask], axis=-1)
        h0 = np.tanh(x @ p["w_ih0"].T + p["b_ih0"]
                     + (h[0] * r_mask[0]) @ p["w_hh0"].T + p["b_hh0"])
        h1 = np.tanh(h0 @ p["w_ih1"].T + p["b_ih1"]
                     + (h[1] * r_mask[1]) @ p["w_hh1"].T + p["b_hh1"])
        h = [h0, h1]
        o_cat = softmax(h1 @ p["w_cat"].T + p["b_cat"])
        o_val = h1 @ p["w_val"].T + p["b_val"] + val[i]
        out_cat.append(o_cat)
        out_val.append(o_val)
        hid_batch.append(h1)
        j = i + 1
        idx = np.isnan(val[j]); val[j][idx] = o_val[idx]
        idx = np.isnan(cat[j]); cat[j][idx] = o_cat[idx]
    return np.stack(out_cat), np.stack(out_val), np.stack(hid_batch)


if __name__ == "__main__":
    # Model hyper-parameters (small, consistent with the module's __init__):
    # nb_classes=4, nb_measures=8, h_size=32, nb_layers=2; seq T=8, batch B=8.
    T, B, C, M, H = 8, 8, 4, 8, 32
    key = jax.random.PRNGKey(0)
    ks = jax.random.split(key, 16)

    def init_w(k, shape, fan_in):
        bound = 1.0 / np.sqrt(fan_in)
        return jax.random.uniform(k, shape, jnp.float32, -bound, bound)

    params = {
        "w_ih0": init_w(ks[0], (H, C + M), C + M),
        "w_hh0": init_w(ks[1], (H, H), H),
        "b_ih0": init_w(ks[2], (H,), H),
        "b_hh0": init_w(ks[3], (H,), H),
        "w_ih1": init_w(ks[4], (H, H), H),
        "w_hh1": init_w(ks[5], (H, H), H),
        "b_ih1": init_w(ks[6], (H,), H),
        "b_hh1": init_w(ks[7], (H,), H),
        "w_cat": init_w(ks[8], (C, H), H),
        "b_cat": init_w(ks[9], (C,), H),
        "w_val": init_w(ks[10], (M, H), H),
        "b_val": init_w(ks[11], (M,), H),
    }

    cat_seq = jax.random.normal(ks[12], (T, B, C), jnp.float32)
    val_seq = jax.random.normal(ks[13], (T, B, M), jnp.float32)
    # Inject missing values (NaNs) at time steps >= 1 (step 0 fully observed,
    # matching the PyTorch reference which never imputes step 0).
    cat_nan = jax.random.bernoulli(ks[14], 0.3, (T - 1, B, C))
    val_nan = jax.random.bernoulli(ks[15], 0.3, (T - 1, B, M))
    cat_seq = cat_seq.at[1:].set(jnp.where(cat_nan, jnp.nan, cat_seq[1:]))
    val_seq = val_seq.at[1:].set(jnp.where(val_nan, jnp.nan, val_seq[1:]))

    # Parameter packing hoisted out of the per-call path (once per model).
    packed = pack_params(params)

    # ONE kernel run yields o_cat, o_val and the latent hidden states.
    out_cat, out_val, hid = rnn_forward_all(
        cat_seq, val_seq, packed["w_blob"], packed["b_blob"], C=C, M=M, H=H)
    (out_cat, out_val, hid) = jax.block_until_ready((out_cat, out_val, hid))

    ref_cat, ref_val, ref_hid = _ref_forward_numpy(cat_seq, val_seq, params)

    assert out_cat.shape == (T - 1, B, C) and out_val.shape == (T - 1, B, M)
    assert hid.shape == (T - 1, B, H)
    assert np.all(np.isfinite(np.asarray(out_cat)))
    assert np.all(np.isfinite(np.asarray(out_val)))
    # bf16 MXU operands with f32 accumulation; error through the 7-step
    # imputation feedback stays well inside the 5e-2 envelope.
    np.testing.assert_allclose(np.asarray(out_cat), ref_cat, rtol=5e-2, atol=5e-2)
    np.testing.assert_allclose(np.asarray(out_val), ref_val, rtol=5e-2, atol=5e-2)
    np.testing.assert_allclose(np.asarray(hid), ref_hid, rtol=5e-2, atol=5e-2)

    print("KERNEL_OK")
</pallas_src>

<mosaic_0001>
module attributes {stable_mosaic.version = 11 : i64} {
  func.func @kernel(%arg0: i32, %arg1: memref<8x8x12xf32, #tpu.memory_space<vmem>>, %arg2: memref<3x64x32xbf16, #tpu.memory_space<vmem>>, %arg3: memref<3x1x32xf32, #tpu.memory_space<vmem>>, %arg4: memref<7x8x44xf32, #tpu.memory_space<vmem>>) attributes {dimension_semantics = [#tpu.dimension_semantics<parallel>], iteration_bounds = array<i64: 1>, scalar_prefetch = 0 : i64, scratch_operands = 0 : i64, tpu.core_type = #tpu.core_type<tc>, window_params = [{transform_indices = @transform_0, window_bounds = array<i64: 8, 8, 12>}, {pipeline_mode = #tpu.pipeline_mode<synchronous>, transform_indices = @transform_1, window_bounds = array<i64: 3, 64, 32>}, {pipeline_mode = #tpu.pipeline_mode<synchronous>, transform_indices = @transform_2, window_bounds = array<i64: 3, 1, 32>}, {transform_indices = @transform_3, window_bounds = array<i64: 7, 8, 44>}]} {
    %c0 = arith.constant 0 : index
    %c0_0 = arith.constant 0 : index
    %c0_1 = arith.constant 0 : index
    %0 = vector.load %arg2[%c0, %c0_0, %c0_1] : memref<3x64x32xbf16, #tpu.memory_space<vmem>>, vector<1x44x32xbf16>
    %1 = vector.shape_cast %0 : vector<1x44x32xbf16> to vector<44x32xbf16>
    %c1 = arith.constant 1 : index
    %c0_2 = arith.constant 0 : index
    %c0_3 = arith.constant 0 : index
    %2 = vector.load %arg2[%c1, %c0_2, %c0_3] : memref<3x64x32xbf16, #tpu.memory_space<vmem>>, vector<1x64x32xbf16>
    %3 = vector.shape_cast %2 : vector<1x64x32xbf16> to vector<64x32xbf16>
    %c2 = arith.constant 2 : index
    %c0_4 = arith.constant 0 : index
    %c0_5 = arith.constant 0 : index
    %4 = vector.load %arg2[%c2, %c0_4, %c0_5] : memref<3x64x32xbf16, #tpu.memory_space<vmem>>, vector<1x32x12xbf16>
    %5 = vector.shape_cast %4 : vector<1x32x12xbf16> to vector<32x12xbf16>
    %c0_6 = arith.constant 0 : index
    %c0_7 = arith.constant 0 : index
    %c0_8 = arith.constant 0 : index
    %6 = vector.load %arg3[%c0_6, %c0_7, %c0_8] : memref<3x1x32xf32, #tpu.memory_space<vmem>>, vector<1x1x32xf32>
    %7 = vector.shape_cast %6 : vector<1x1x32xf32> to vector<1x32xf32>
    %8 = vector.shape_cast %7 : vector<1x32xf32> to vector<1x32xf32>
    %9 = vector.broadcast %8 : vector<1x32xf32> to vector<8x32xf32>
    %c1_9 = arith.constant 1 : index
    %c0_10 = arith.constant 0 : index
    %c0_11 = arith.constant 0 : index
    %10 = vector.load %arg3[%c1_9, %c0_10, %c0_11] : memref<3x1x32xf32, #tpu.memory_space<vmem>>, vector<1x1x32xf32>
    %11 = vector.shape_cast %10 : vector<1x1x32xf32> to vector<1x32xf32>
    %12 = vector.shape_cast %11 : vector<1x32xf32> to vector<1x32xf32>
    %13 = vector.broadcast %12 : vector<1x32xf32> to vector<8x32xf32>
    %c2_12 = arith.constant 2 : index
    %c0_13 = arith.constant 0 : index
    %c0_14 = arith.constant 0 : index
    %14 = vector.load %arg3[%c2_12, %c0_13, %c0_14] : memref<3x1x32xf32, #tpu.memory_space<vmem>>, vector<1x1x12xf32>
    %15 = vector.shape_cast %14 : vector<1x1x12xf32> to vector<1x12xf32>
    %16 = vector.shape_cast %15 : vector<1x12xf32> to vector<1x12xf32>
    %17 = vector.broadcast %16 : vector<1x12xf32> to vector<8x12xf32>
    %18 = tpu.iota {dimensions = array<i32: 1>} : vector<8x12xi32>
    %c4_i32 = arith.constant 4 : i32
    %19 = vector.broadcast %c4_i32 : i32 to vector<8x12xi32>
    %20 = arith.cmpi slt, %18, %19 : vector<8x12xi32>
    %cst = arith.constant 0.000000e+00 : f32
    %cst_15 = arith.constant 0xFF800000 : f32
    %21 = vector.broadcast %cst : f32 to vector<8x12xf32>
    %22 = vector.broadcast %cst_15 : f32 to vector<8x12xf32>
    %23 = arith.select %20, %21, %22 : vector<8x12xi1>, vector<8x12xf32>
    %c0_16 = arith.constant 0 : index
    %c0_17 = arith.constant 0 : index
    %c0_18 = arith.constant 0 : index
    %24 = vector.load %arg1[%c0_16, %c0_17, %c0_18] : memref<8x8x12xf32, #tpu.memory_space<vmem>>, vector<1x8x12xf32>
    %25 = vector.shape_cast %24 : vector<1x8x12xf32> to vector<8x12xf32>
    %cst_19 = arith.constant 0.000000e+00 : f32
    %26 = vector.broadcast %cst_19 : f32 to vector<8x32xf32>
    %cst_20 = arith.constant 0.000000e+00 : f32
    %27 = vector.broadcast %cst_20 : f32 to vector<8x32xf32>
    %28 = tpu.concatenate %25, %26 in 1 : vector<8x12xf32>, vector<8x32xf32> -> vector<8x44xf32>
    %29 = arith.truncf %28 : vector<8x44xf32> to vector<8x44xbf16>
    %cst_21 = arith.constant dense<0.000000e+00> : vector<8x32xf32>
    %30 = tpu.matmul %29, %1, %cst_21 {dimension_numbers = #tpu.dot_dimension_numbers<[1], [0], [0], [1], [0, 0, 1, 1], [], []>} : vector<8x44xbf16>, vector<44x32xbf16>, vector<8x32xf32> -> vector<8x32xf32>
    %31 = arith.addf %30, %9 : vector<8x32xf32>
    %32 = math.tanh %31 : vector<8x32xf32>
    %33 = tpu.concatenate %32, %27 in 1 : vector<8x32xf32>, vector<8x32xf32> -> vector<8x64xf32>
    %34 = arith.truncf %33 : vector<8x64xf32> to vector<8x64xbf16>
    %cst_22 = arith.constant dense<0.000000e+00> : vector<8x32xf32>
    %35 = tpu.matmul %34, %3, %cst_22 {dimension_numbers = #tpu.dot_dimension_numbers<[1], [0], [0], [1], [0, 0, 1, 1], [], []>} : vector<8x64xbf16>, vector<64x32xbf16>, vector<8x32xf32> -> vector<8x32xf32>
    %36 = arith.addf %35, %13 : vector<8x32xf32>
    %37 = math.tanh %36 : vector<8x32xf32>
    %38 = arith.truncf %37 : vector<8x32xf32> to vector<8x32xbf16>
    %cst_23 = arith.constant dense<0.000000e+00> : vector<8x12xf32>
    %39 = tpu.matmul %38, %5, %cst_23 {dimension_numbers = #tpu.dot_dimension_numbers<[1], [0], [0], [1], [0, 0, 1, 1], [], []>} : vector<8x32xbf16>, vector<32x12xbf16>, vector<8x12xf32> -> vector<8x12xf32>
    %40 = arith.addf %39, %17 : vector<8x12xf32>
    %41 = arith.addf %40, %23 : vector<8x12xf32>
    %cst_24 = arith.constant dense<0xFF800000> : vector<8xf32>
    %42 = vector.multi_reduction <maximumf>, %41, %cst_24 [1] : vector<8x12xf32> to vector<8xf32>
    %43 = vector.shape_cast %42 : vector<8xf32> to vector<8x1xf32>
    %44 = vector.broadcast %43 : vector<8x1xf32> to vector<8x12xf32>
    %45 = arith.subf %41, %44 : vector<8x12xf32>
    %46 = math.exp %45 : vector<8x12xf32>
    %cst_25 = arith.constant dense<0.000000e+00> : vector<8xf32>
    %47 = vector.multi_reduction <add>, %46, %cst_25 [1] : vector<8x12xf32> to vector<8xf32>
    %48 = vector.shape_cast %47 : vector<8xf32> to vector<8x1xf32>
    %49 = tpu.reciprocal %48 : vector<8x1xf32> -> vector<8x1xf32>
    %50 = vector.broadcast %49 : vector<8x1xf32> to vector<8x12xf32>
    %51 = arith.mulf %46, %50 : vector<8x12xf32>
    %52 = arith.addf %40, %25 : vector<8x12xf32>
    %53 = arith.select %20, %51, %52 : vector<8x12xi1>, vector<8x12xf32>
    %54 = tpu.concatenate %53, %37 in 1 : vector<8x12xf32>, vector<8x32xf32> -> vector<8x44xf32>
    %c0_26 = arith.constant 0 : index
    %c0_27 = arith.constant 0 : index
    %c0_28 = arith.constant 0 : index
    %55 = vector.load %arg4[%c0_26, %c0_27, %c0_28] : memref<7x8x44xf32, #tpu.memory_space<vmem>>, vector<1x8x44xf32>
    %56 = vector.shape_cast %55 : vector<1x8x44xf32> to vector<8x44xf32>
    %57 = vector.shape_cast %54 : vector<8x44xf32> to vector<1x8x44xf32>
    tpu.vector_store %arg4[%c0_26, %c0_27, %c0_28], %57 {strides = array<i32>} : memref<7x8x44xf32, #tpu.memory_space<vmem>>, vector<1x8x44xf32>,
    %c1_29 = arith.constant 1 : index
    %c0_30 = arith.constant 0 : index
    %c0_31 = arith.constant 0 : index
    %58 = vector.load %arg1[%c1_29, %c0_30, %c0_31] : memref<8x8x12xf32, #tpu.memory_space<vmem>>, vector<1x8x12xf32>
    %59 = vector.shape_cast %58 : vector<1x8x12xf32> to vector<8x12xf32>
    %60 = arith.cmpf one, %59, %59 : vector<8x12xf32>
    %61 = arith.select %60, %53, %59 : vector<8x12xi1>, vector<8x12xf32>
    %62 = tpu.concatenate %61, %32 in 1 : vector<8x12xf32>, vector<8x32xf32> -> vector<8x44xf32>
    %63 = arith.truncf %62 : vector<8x44xf32> to vector<8x44xbf16>
    %cst_32 = arith.constant dense<0.000000e+00> : vector<8x32xf32>
    %64 = tpu.matmul %63, %1, %cst_32 {dimension_numbers = #tpu.dot_dimension_numbers<[1], [0], [0], [1], [0, 0, 1, 1], [], []>} : vector<8x44xbf16>, vector<44x32xbf16>, vector<8x32xf32> -> vector<8x32xf32>
    %65 = arith.addf %64, %9 : vector<8x32xf32>
    %66 = math.tanh %65 : vector<8x32xf32>
    %67 = tpu.concatenate %66, %37 in 1 : vector<8x32xf32>, vector<8x32xf32> -> vector<8x64xf32>
    %68 = arith.truncf %67 : vector<8x64xf32> to vector<8x64xbf16>
    %cst_33 = arith.constant dense<0.000000e+00> : vector<8x32xf32>
    %69 = tpu.matmul %68, %3, %cst_33 {dimension_numbers = #tpu.dot_dimension_numbers<[1], [0], [0], [1], [0, 0, 1, 1], [], []>} : vector<8x64xbf16>, vector<64x32xbf16>, vector<8x32xf32> -> vector<8x32xf32>
    %70 = arith.addf %69, %13 : vector<8x32xf32>
    %71 = math.tanh %70 : vector<8x32xf32>
    %72 = arith.truncf %71 : vector<8x32xf32> to vector<8x32xbf16>
    %cst_34 = arith.constant dense<0.000000e+00> : vector<8x12xf32>
    %73 = tpu.matmul %72, %5, %cst_34 {dimension_numbers = #tpu.dot_dimension_numbers<[1], [0], [0], [1], [0, 0, 1, 1], [], []>} : vector<8x32xbf16>, vector<32x12xbf16>, vector<8x12xf32> -> vector<8x12xf32>
    %74 = arith.addf %73, %17 : vector<8x12xf32>
    %75 = arith.addf %74, %23 : vector<8x12xf32>
    %cst_35 = arith.constant dense<0xFF800000> : vector<8xf32>
    %76 = vector.multi_reduction <maximumf>, %75, %cst_35 [1] : vector<8x12xf32> to vector<8xf32>
    %77 = vector.shape_cast %76 : vector<8xf32> to vector<8x1xf32>
    %78 = vector.broadcast %77 : vector<8x1xf32> to vector<8x12xf32>
    %79 = arith.subf %75, %78 : vector<8x12xf32>
    %80 = math.exp %79 : vector<8x12xf32>
    %cst_36 = arith.constant dense<0.000000e+00> : vector<8xf32>
    %81 = vector.multi_reduction <add>, %80, %cst_36 [1] : vector<8x12xf32> to vector<8xf32>
    %82 = vector.shape_cast %81 : vector<8xf32> to vector<8x1xf32>
    %83 = tpu.reciprocal %82 : vector<8x1xf32> -> vector<8x1xf32>
    %84 = vector.broadcast %83 : vector<8x1xf32> to vector<8x12xf32>
    %85 = arith.mulf %80, %84 : vector<8x12xf32>
    %86 = arith.addf %74, %61 : vector<8x12xf32>
    %87 = arith.select %20, %85, %86 : vector<8x12xi1>, vector<8x12xf32>
    %88 = tpu.concatenate %87, %71 in 1 : vector<8x12xf32>, vector<8x32xf32> -> vector<8x44xf32>
    %c1_37 = arith.constant 1 : index
    %c0_38 = arith.constant 0 : index
    %c0_39 = arith.constant 0 : index
    %89 = vector.load %arg4[%c1_37, %c0_38, %c0_39] : memref<7x8x44xf32, #tpu.memory_space<vmem>>, vector<1x8x44xf32>
    %90 = vector.shape_cast %89 : vector<1x8x44xf32> to vector<8x44xf32>
    %91 = vector.shape_cast %88 : vector<8x44xf32> to vector<1x8x44xf32>
    tpu.vector_store %arg4[%c1_37, %c0_38, %c0_39], %91 {strides = array<i32>} : memref<7x8x44xf32, #tpu.memory_space<vmem>>, vector<1x8x44xf32>,
    %c2_40 = arith.constant 2 : index
    %c0_41 = arith.constant 0 : index
    %c0_42 = arith.constant 0 : index
    %92 = vector.load %arg1[%c2_40, %c0_41, %c0_42] : memref<8x8x12xf32, #tpu.memory_space<vmem>>, vector<1x8x12xf32>
    %93 = vector.shape_cast %92 : vector<1x8x12xf32> to vector<8x12xf32>
    %94 = arith.cmpf one, %93, %93 : vector<8x12xf32>
    %95 = arith.select %94, %87, %93 : vector<8x12xi1>, vector<8x12xf32>
    %96 = tpu.concatenate %95, %66 in 1 : vector<8x12xf32>, vector<8x32xf32> -> vector<8x44xf32>
    %97 = arith.truncf %96 : vector<8x44xf32> to vector<8x44xbf16>
    %cst_43 = arith.constant dense<0.000000e+00> : vector<8x32xf32>
    %98 = tpu.matmul %97, %1, %cst_43 {dimension_numbers = #tpu.dot_dimension_numbers<[1], [0], [0], [1], [0, 0, 1, 1], [], []>} : vector<8x44xbf16>, vector<44x32xbf16>, vector<8x32xf32> -> vector<8x32xf32>
    %99 = arith.addf %98, %9 : vector<8x32xf32>
    %100 = math.tanh %99 : vector<8x32xf32>
    %101 = tpu.concatenate %100, %71 in 1 : vector<8x32xf32>, vector<8x32xf32> -> vector<8x64xf32>
    %102 = arith.truncf %101 : vector<8x64xf32> to vector<8x64xbf16>
    %cst_44 = arith.constant dense<0.000000e+00> : vector<8x32xf32>
    %103 = tpu.matmul %102, %3, %cst_44 {dimension_numbers = #tpu.dot_dimension_numbers<[1], [0], [0], [1], [0, 0, 1, 1], [], []>} : vector<8x64xbf16>, vector<64x32xbf16>, vector<8x32xf32> -> vector<8x32xf32>
    %104 = arith.addf %103, %13 : vector<8x32xf32>
    %105 = math.tanh %104 : vector<8x32xf32>
    %106 = arith.truncf %105 : vector<8x32xf32> to vector<8x32xbf16>
    %cst_45 = arith.constant dense<0.000000e+00> : vector<8x12xf32>
    %107 = tpu.matmul %106, %5, %cst_45 {dimension_numbers = #tpu.dot_dimension_numbers<[1], [0], [0], [1], [0, 0, 1, 1], [], []>} : vector<8x32xbf16>, vector<32x12xbf16>, vector<8x12xf32> -> vector<8x12xf32>
    %108 = arith.addf %107, %17 : vector<8x12xf32>
    %109 = arith.addf %108, %23 : vector<8x12xf32>
    %cst_46 = arith.constant dense<0xFF800000> : vector<8xf32>
    %110 = vector.multi_reduction <maximumf>, %109, %cst_46 [1] : vector<8x12xf32> to vector<8xf32>
    %111 = vector.shape_cast %110 : vector<8xf32> to vector<8x1xf32>
    %112 = vector.broadcast %111 : vector<8x1xf32> to vector<8x12xf32>
    %113 = arith.subf %109, %112 : vector<8x12xf32>
    %114 = math.exp %113 : vector<8x12xf32>
    %cst_47 = arith.constant dense<0.000000e+00> : vector<8xf32>
    %115 = vector.multi_reduction <add>, %114, %cst_47 [1] : vector<8x12xf32> to vector<8xf32>
    %116 = vector.shape_cast %115 : vector<8xf32> to vector<8x1xf32>
    %117 = tpu.reciprocal %116 : vector<8x1xf32> -> vector<8x1xf32>
    %118 = vector.broadcast %117 : vector<8x1xf32> to vector<8x12xf32>
    %119 = arith.mulf %114, %118 : vector<8x12xf32>
    %120 = arith.addf %108, %95 : vector<8x12xf32>
    %121 = arith.select %20, %119, %120 : vector<8x12xi1>, vector<8x12xf32>
    %122 = tpu.concatenate %121, %105 in 1 : vector<8x12xf32>, vector<8x32xf32> -> vector<8x44xf32>
    %c2_48 = arith.constant 2 : index
    %c0_49 = arith.constant 0 : index
    %c0_50 = arith.constant 0 : index
    %123 = vector.load %arg4[%c2_48, %c0_49, %c0_50] : memref<7x8x44xf32, #tpu.memory_space<vmem>>, vector<1x8x44xf32>
    %124 = vector.shape_cast %123 : vector<1x8x44xf32> to vector<8x44xf32>
    %125 = vector.shape_cast %122 : vector<8x44xf32> to vector<1x8x44xf32>
    tpu.vector_store %arg4[%c2_48, %c0_49, %c0_50], %125 {strides = array<i32>} : memref<7x8x44xf32, #tpu.memory_space<vmem>>, vector<1x8x44xf32>,
    %c3 = arith.constant 3 : index
    %c0_51 = arith.constant 0 : index
    %c0_52 = arith.constant 0 : index
    %126 = vector.load %arg1[%c3, %c0_51, %c0_52] : memref<8x8x12xf32, #tpu.memory_space<vmem>>, vector<1x8x12xf32>
    %127 = vector.shape_cast %126 : vector<1x8x12xf32> to vector<8x12xf32>
    %128 = arith.cmpf one, %127, %127 : vector<8x12xf32>
    %129 = arith.select %128, %121, %127 : vector<8x12xi1>, vector<8x12xf32>
    %130 = tpu.concatenate %129, %100 in 1 : vector<8x12xf32>, vector<8x32xf32> -> vector<8x44xf32>
    %131 = arith.truncf %130 : vector<8x44xf32> to vector<8x44xbf16>
    %cst_53 = arith.constant dense<0.000000e+00> : vector<8x32xf32>
    %132 = tpu.matmul %131, %1, %cst_53 {dimension_numbers = #tpu.dot_dimension_numbers<[1], [0], [0], [1], [0, 0, 1, 1], [], []>} : vector<8x44xbf16>, vector<44x32xbf16>, vector<8x32xf32> -> vector<8x32xf32>
    %133 = arith.addf %132, %9 : vector<8x32xf32>
    %134 = math.tanh %133 : vector<8x32xf32>
    %135 = tpu.concatenate %134, %105 in 1 : vector<8x32xf32>, vector<8x32xf32> -> vector<8x64xf32>
    %136 = arith.truncf %135 : vector<8x64xf32> to vector<8x64xbf16>
    %cst_54 = arith.constant dense<0.000000e+00> : vector<8x32xf32>
    %137 = tpu.matmul %136, %3, %cst_54 {dimension_numbers = #tpu.dot_dimension_numbers<[1], [0], [0], [1], [0, 0, 1, 1], [], []>} : vector<8x64xbf16>, vector<64x32xbf16>, vector<8x32xf32> -> vector<8x32xf32>
    %138 = arith.addf %137, %13 : vector<8x32xf32>
    %139 = math.tanh %138 : vector<8x32xf32>
    %140 = arith.truncf %139 : vector<8x32xf32> to vector<8x32xbf16>
    %cst_55 = arith.constant dense<0.000000e+00> : vector<8x12xf32>
    %141 = tpu.matmul %140, %5, %cst_55 {dimension_numbers = #tpu.dot_dimension_numbers<[1], [0], [0], [1], [0, 0, 1, 1], [], []>} : vector<8x32xbf16>, vector<32x12xbf16>, vector<8x12xf32> -> vector<8x12xf32>
    %142 = arith.addf %141, %17 : vector<8x12xf32>
    %143 = arith.addf %142, %23 : vector<8x12xf32>
    %cst_56 = arith.constant dense<0xFF800000> : vector<8xf32>
    %144 = vector.multi_reduction <maximumf>, %143, %cst_56 [1] : vector<8x12xf32> to vector<8xf32>
    %145 = vector.shape_cast %144 : vector<8xf32> to vector<8x1xf32>
    %146 = vector.broadcast %145 : vector<8x1xf32> to vector<8x12xf32>
    %147 = arith.subf %143, %146 : vector<8x12xf32>
    %148 = math.exp %147 : vector<8x12xf32>
    %cst_57 = arith.constant dense<0.000000e+00> : vector<8xf32>
    %149 = vector.multi_reduction <add>, %148, %cst_57 [1] : vector<8x12xf32> to vector<8xf32>
    %150 = vector.shape_cast %149 : vector<8xf32> to vector<8x1xf32>
    %151 = tpu.reciprocal %150 : vector<8x1xf32> -> vector<8x1xf32>
    %152 = vector.broadcast %151 : vector<8x1xf32> to vector<8x12xf32>
    %153 = arith.mulf %148, %152 : vector<8x12xf32>
    %154 = arith.addf %142, %129 : vector<8x12xf32>
    %155 = arith.select %20, %153, %154 : vector<8x12xi1>, vector<8x12xf32>
    %156 = tpu.concatenate %155, %139 in 1 : vector<8x12xf32>, vector<8x32xf32> -> vector<8x44xf32>
    %c3_58 = arith.constant 3 : index
    %c0_59 = arith.constant 0 : index
    %c0_60 = arith.constant 0 : index
    %157 = vector.load %arg4[%c3_58, %c0_59, %c0_60] : memref<7x8x44xf32, #tpu.memory_space<vmem>>, vector<1x8x44xf32>
    %158 = vector.shape_cast %157 : vector<1x8x44xf32> to vector<8x44xf32>
    %159 = vector.shape_cast %156 : vector<8x44xf32> to vector<1x8x44xf32>
    tpu.vector_store %arg4[%c3_58, %c0_59, %c0_60], %159 {strides = array<i32>} : memref<7x8x44xf32, #tpu.memory_space<vmem>>, vector<1x8x44xf32>,
    %c4 = arith.constant 4 : index
    %c0_61 = arith.constant 0 : index
    %c0_62 = arith.constant 0 : index
    %160 = vector.load %arg1[%c4, %c0_61, %c0_62] : memref<8x8x12xf32, #tpu.memory_space<vmem>>, vector<1x8x12xf32>
    %161 = vector.shape_cast %160 : vector<1x8x12xf32> to vector<8x12xf32>
    %162 = arith.cmpf one, %161, %161 : vector<8x12xf32>
    %163 = arith.select %162, %155, %161 : vector<8x12xi1>, vector<8x12xf32>
    %164 = tpu.concatenate %163, %134 in 1 : vector<8x12xf32>, vector<8x32xf32> -> vector<8x44xf32>
    %165 = arith.truncf %164 : vector<8x44xf32> to vector<8x44xbf16>
    %cst_63 = arith.constant dense<0.000000e+00> : vector<8x32xf32>
    %166 = tpu.matmul %165, %1, %cst_63 {dimension_numbers = #tpu.dot_dimension_numbers<[1], [0], [0], [1], [0, 0, 1, 1], [], []>} : vector<8x44xbf16>, vector<44x32xbf16>, vector<8x32xf32> -> vector<8x32xf32>
    %167 = arith.addf %166, %9 : vector<8x32xf32>
    %168 = math.tanh %167 : vector<8x32xf32>
    %169 = tpu.concatenate %168, %139 in 1 : vector<8x32xf32>, vector<8x32xf32> -> vector<8x64xf32>
    %170 = arith.truncf %169 : vector<8x64xf32> to vector<8x64xbf16>
    %cst_64 = arith.constant dense<0.000000e+00> : vector<8x32xf32>
    %171 = tpu.matmul %170, %3, %cst_64 {dimension_numbers = #tpu.dot_dimension_numbers<[1], [0], [0], [1], [0, 0, 1, 1], [], []>} : vector<8x64xbf16>, vector<64x32xbf16>, vector<8x32xf32> -> vector<8x32xf32>
    %172 = arith.addf %171, %13 : vector<8x32xf32>
    %173 = math.tanh %172 : vector<8x32xf32>
    %174 = arith.truncf %173 : vector<8x32xf32> to vector<8x32xbf16>
    %cst_65 = arith.constant dense<0.000000e+00> : vector<8x12xf32>
    %175 = tpu.matmul %174, %5, %cst_65 {dimension_numbers = #tpu.dot_dimension_numbers<[1], [0], [0], [1], [0, 0, 1, 1], [], []>} : vector<8x32xbf16>, vector<32x12xbf16>, vector<8x12xf32> -> vector<8x12xf32>
    %176 = arith.addf %175, %17 : vector<8x12xf32>
    %177 = arith.addf %176, %23 : vector<8x12xf32>
    %cst_66 = arith.constant dense<0xFF800000> : vector<8xf32>
    %178 = vector.multi_reduction <maximumf>, %177, %cst_66 [1] : vector<8x12xf32> to vector<8xf32>
    %179 = vector.shape_cast %178 : vector<8xf32> to vector<8x1xf32>
    %180 = vector.broadcast %179 : vector<8x1xf32> to vector<8x12xf32>
    %181 = arith.subf %177, %180 : vector<8x12xf32>
    %182 = math.exp %181 : vector<8x12xf32>
    %cst_67 = arith.constant dense<0.000000e+00> : vector<8xf32>
    %183 = vector.multi_reduction <add>, %182, %cst_67 [1] : vector<8x12xf32> to vector<8xf32>
    %184 = vector.shape_cast %183 : vector<8xf32> to vector<8x1xf32>
    %185 = tpu.reciprocal %184 : vector<8x1xf32> -> vector<8x1xf32>
    %186 = vector.broadcast %185 : vector<8x1xf32> to vector<8x12xf32>
    %187 = arith.mulf %182, %186 : vector<8x12xf32>
    %188 = arith.addf %176, %163 : vector<8x12xf32>
    %189 = arith.select %20, %187, %188 : vector<8x12xi1>, vector<8x12xf32>
    %190 = tpu.concatenate %189, %173 in 1 : vector<8x12xf32>, vector<8x32xf32> -> vector<8x44xf32>
    %c4_68 = arith.constant 4 : index
    %c0_69 = arith.constant 0 : index
    %c0_70 = arith.constant 0 : index
    %191 = vector.load %arg4[%c4_68, %c0_69, %c0_70] : memref<7x8x44xf32, #tpu.memory_space<vmem>>, vector<1x8x44xf32>
    %192 = vector.shape_cast %191 : vector<1x8x44xf32> to vector<8x44xf32>
    %193 = vector.shape_cast %190 : vector<8x44xf32> to vector<1x8x44xf32>
    tpu.vector_store %arg4[%c4_68, %c0_69, %c0_70], %193 {strides = array<i32>} : memref<7x8x44xf32, #tpu.memory_space<vmem>>, vector<1x8x44xf32>,
    %c5 = arith.constant 5 : index
    %c0_71 = arith.constant 0 : index
    %c0_72 = arith.constant 0 : index
    %194 = vector.load %arg1[%c5, %c0_71, %c0_72] : memref<8x8x12xf32, #tpu.memory_space<vmem>>, vector<1x8x12xf32>
    %195 = vector.shape_cast %194 : vector<1x8x12xf32> to vector<8x12xf32>
    %196 = arith.cmpf one, %195, %195 : vector<8x12xf32>
    %197 = arith.select %196, %189, %195 : vector<8x12xi1>, vector<8x12xf32>
    %198 = tpu.concatenate %197, %168 in 1 : vector<8x12xf32>, vector<8x32xf32> -> vector<8x44xf32>
    %199 = arith.truncf %198 : vector<8x44xf32> to vector<8x44xbf16>
    %cst_73 = arith.constant dense<0.000000e+00> : vector<8x32xf32>
    %200 = tpu.matmul %199, %1, %cst_73 {dimension_numbers = #tpu.dot_dimension_numbers<[1], [0], [0], [1], [0, 0, 1, 1], [], []>} : vector<8x44xbf16>, vector<44x32xbf16>, vector<8x32xf32> -> vector<8x32xf32>
    %201 = arith.addf %200, %9 : vector<8x32xf32>
    %202 = math.tanh %201 : vector<8x32xf32>
    %203 = tpu.concatenate %202, %173 in 1 : vector<8x32xf32>, vector<8x32xf32> -> vector<8x64xf32>
    %204 = arith.truncf %203 : vector<8x64xf32> to vector<8x64xbf16>
    %cst_74 = arith.constant dense<0.000000e+00> : vector<8x32xf32>
    %205 = tpu.matmul %204, %3, %cst_74 {dimension_numbers = #tpu.dot_dimension_numbers<[1], [0], [0], [1], [0, 0, 1, 1], [], []>} : vector<8x64xbf16>, vector<64x32xbf16>, vector<8x32xf32> -> vector<8x32xf32>
    %206 = arith.addf %205, %13 : vector<8x32xf32>
    %207 = math.tanh %206 : vector<8x32xf32>
    %208 = arith.truncf %207 : vector<8x32xf32> to vector<8x32xbf16>
    %cst_75 = arith.constant dense<0.000000e+00> : vector<8x12xf32>
    %209 = tpu.matmul %208, %5, %cst_75 {dimension_numbers = #tpu.dot_dimension_numbers<[1], [0], [0], [1], [0, 0, 1, 1], [], []>} : vector<8x32xbf16>, vector<32x12xbf16>, vector<8x12xf32> -> vector<8x12xf32>
    %210 = arith.addf %209, %17 : vector<8x12xf32>
    %211 = arith.addf %210, %23 : vector<8x12xf32>
    %cst_76 = arith.constant dense<0xFF800000> : vector<8xf32>
    %212 = vector.multi_reduction <maximumf>, %211, %cst_76 [1] : vector<8x12xf32> to vector<8xf32>
    %213 = vector.shape_cast %212 : vector<8xf32> to vector<8x1xf32>
    %214 = vector.broadcast %213 : vector<8x1xf32> to vector<8x12xf32>
    %215 = arith.subf %211, %214 : vector<8x12xf32>
    %216 = math.exp %215 : vector<8x12xf32>
    %cst_77 = arith.constant dense<0.000000e+00> : vector<8xf32>
    %217 = vector.multi_reduction <add>, %216, %cst_77 [1] : vector<8x12xf32> to vector<8xf32>
    %218 = vector.shape_cast %217 : vector<8xf32> to vector<8x1xf32>
    %219 = tpu.reciprocal %218 : vector<8x1xf32> -> vector<8x1xf32>
    %220 = vector.broadcast %219 : vector<8x1xf32> to vector<8x12xf32>
    %221 = arith.mulf %216, %220 : vector<8x12xf32>
    %222 = arith.addf %210, %197 : vector<8x12xf32>
    %223 = arith.select %20, %221, %222 : vector<8x12xi1>, vector<8x12xf32>
    %224 = tpu.concatenate %223, %207 in 1 : vector<8x12xf32>, vector<8x32xf32> -> vector<8x44xf32>
    %c5_78 = arith.constant 5 : index
    %c0_79 = arith.constant 0 : index
    %c0_80 = arith.constant 0 : index
    %225 = vector.load %arg4[%c5_78, %c0_79, %c0_80] : memref<7x8x44xf32, #tpu.memory_space<vmem>>, vector<1x8x44xf32>
    %226 = vector.shape_cast %225 : vector<1x8x44xf32> to vector<8x44xf32>
    %227 = vector.shape_cast %224 : vector<8x44xf32> to vector<1x8x44xf32>
    tpu.vector_store %arg4[%c5_78, %c0_79, %c0_80], %227 {strides = array<i32>} : memref<7x8x44xf32, #tpu.memory_space<vmem>>, vector<1x8x44xf32>,
    %c6 = arith.constant 6 : index
    %c0_81 = arith.constant 0 : index
    %c0_82 = arith.constant 0 : index
    %228 = vector.load %arg1[%c6, %c0_81, %c0_82] : memref<8x8x12xf32, #tpu.memory_space<vmem>>, vector<1x8x12xf32>
    %229 = vector.shape_cast %228 : vector<1x8x12xf32> to vector<8x12xf32>
    %230 = arith.cmpf one, %229, %229 : vector<8x12xf32>
    %231 = arith.select %230, %223, %229 : vector<8x12xi1>, vector<8x12xf32>
    %232 = tpu.concatenate %231, %202 in 1 : vector<8x12xf32>, vector<8x32xf32> -> vector<8x44xf32>
    %233 = arith.truncf %232 : vector<8x44xf32> to vector<8x44xbf16>
    %cst_83 = arith.constant dense<0.000000e+00> : vector<8x32xf32>
    %234 = tpu.matmul %233, %1, %cst_83 {dimension_numbers = #tpu.dot_dimension_numbers<[1], [0], [0], [1], [0, 0, 1, 1], [], []>} : vector<8x44xbf16>, vector<44x32xbf16>, vector<8x32xf32> -> vector<8x32xf32>
    %235 = arith.addf %234, %9 : vector<8x32xf32>
    %236 = math.tanh %235 : vector<8x32xf32>
    %237 = tpu.concatenate %236, %207 in 1 : vector<8x32xf32>, vector<8x32xf32> -> vector<8x64xf32>
    %238 = arith.truncf %237 : vector<8x64xf32> to vector<8x64xbf16>
    %cst_84 = arith.constant dense<0.000000e+00> : vector<8x32xf32>
    %239 = tpu.matmul %238, %3, %cst_84 {dimension_numbers = #tpu.dot_dimension_numbers<[1], [0], [0], [1], [0, 0, 1, 1], [], []>} : vector<8x64xbf16>, vector<64x32xbf16>, vector<8x32xf32> -> vector<8x32xf32>
    %240 = arith.addf %239, %13 : vector<8x32xf32>
    %241 = math.tanh %240 : vector<8x32xf32>
    %242 = arith.truncf %241 : vector<8x32xf32> to vector<8x32xbf16>
    %cst_85 = arith.constant dense<0.000000e+00> : vector<8x12xf32>
    %243 = tpu.matmul %242, %5, %cst_85 {dimension_numbers = #tpu.dot_dimension_numbers<[1], [0], [0], [1], [0, 0, 1, 1], [], []>} : vector<8x32xbf16>, vector<32x12xbf16>, vector<8x12xf32> -> vector<8x12xf32>
    %244 = arith.addf %243, %17 : vector<8x12xf32>
    %245 = arith.addf %244, %23 : vector<8x12xf32>
    %cst_86 = arith.constant dense<0xFF800000> : vector<8xf32>
    %246 = vector.multi_reduction <maximumf>, %245, %cst_86 [1] : vector<8x12xf32> to vector<8xf32>
    %247 = vector.shape_cast %246 : vector<8xf32> to vector<8x1xf32>
    %248 = vector.broadcast %247 : vector<8x1xf32> to vector<8x12xf32>
    %249 = arith.subf %245, %248 : vector<8x12xf32>
    %250 = math.exp %249 : vector<8x12xf32>
    %cst_87 = arith.constant dense<0.000000e+00> : vector<8xf32>
    %251 = vector.multi_reduction <add>, %250, %cst_87 [1] : vector<8x12xf32> to vector<8xf32>
    %252 = vector.shape_cast %251 : vector<8xf32> to vector<8x1xf32>
    %253 = tpu.reciprocal %252 : vector<8x1xf32> -> vector<8x1xf32>
    %254 = vector.broadcast %253 : vector<8x1xf32> to vector<8x12xf32>
    %255 = arith.mulf %250, %254 : vector<8x12xf32>
    %256 = arith.addf %244, %231 : vector<8x12xf32>
    %257 = arith.select %20, %255, %256 : vector<8x12xi1>, vector<8x12xf32>
    %258 = tpu.concatenate %257, %241 in 1 : vector<8x12xf32>, vector<8x32xf32> -> vector<8x44xf32>
    %c6_88 = arith.constant 6 : index
    %c0_89 = arith.constant 0 : index
    %c0_90 = arith.constant 0 : index
    %259 = vector.load %arg4[%c6_88, %c0_89, %c0_90] : memref<7x8x44xf32, #tpu.memory_space<vmem>>, vector<1x8x44xf32>
    %260 = vector.shape_cast %259 : vector<1x8x44xf32> to vector<8x44xf32>
    %261 = vector.shape_cast %258 : vector<8x44xf32> to vector<1x8x44xf32>
    tpu.vector_store %arg4[%c6_88, %c0_89, %c0_90], %261 {strides = array<i32>} : memref<7x8x44xf32, #tpu.memory_space<vmem>>, vector<1x8x44xf32>,
    return
  }
  func.func @transform_0(%arg0: i32) -> (i32, i32, i32) {
    %c0_i32 = arith.constant 0 : i32
    %c0_i32_0 = arith.constant 0 : i32
    %c0_i32_1 = arith.constant 0 : i32
    return %c0_i32, %arg0, %c0_i32_0 : i32, i32, i32
  }
  func.func @transform_1(%arg0: i32) -> (i32, i32, i32) {
    %c0_i32 = arith.constant 0 : i32
    %c0_i32_0 = arith.constant 0 : i32
    %c0_i32_1 = arith.constant 0 : i32
    %c0_i32_2 = arith.constant 0 : i32
    return %c0_i32, %c0_i32_0, %c0_i32_1 : i32, i32, i32
  }
  func.func @transform_2(%arg0: i32) -> (i32, i32, i32) {
    %c0_i32 = arith.constant 0 : i32
    %c0_i32_0 = arith.constant 0 : i32
    %c0_i32_1 = arith.constant 0 : i32
    %c0_i32_2 = arith.constant 0 : i32
    return %c0_i32, %c0_i32_0, %c0_i32_1 : i32, i32, i32
  }
  func.func @transform_3(%arg0: i32) -> (i32, i32, i32) {
    %c0_i32 = arith.constant 0 : i32
    %c0_i32_0 = arith.constant 0 : i32
    %c0_i32_1 = arith.constant 0 : i32
    return %c0_i32, %arg0, %c0_i32_0 : i32, i32, i32
  }
}

</mosaic_0001>

<llo_original>
// kernel: rnn_forward_all.1
$region0: #{rnn_forward_all.1}
  #allocation0 [shape = 'u32[]', space=smem, size = 0x4, offset = 0x4, fixed_abs, tag = 'smem constant byte address 0x4 - core index']
  #allocation1 [shape = 'u32[144,128]{1,0:T(1,128)}', space=vmem, size = 0x12000, scoped, tag = 'internal scratch']
  %s0 = inlined_call_operand.vmem [shape: f32[8,8,12], index: 0, kind: input, shape index: {}]
  %s1 = inlined_call_operand.vmem [shape: bf16[3,64,32], index: 1, kind: input, shape index: {}]
  %s2 = inlined_call_operand.vmem [shape: f32[3,1,32], index: 2, kind: input, shape index: {}]
  %s3 = inlined_call_operand.vmem [shape: f32[7,8,44], index: 3, kind: output, shape index: {}]
  %s4 = sld [smem:[#allocation0]]
  $region22: #{rnn_forward_all.1} parent=0
    _
  %s6 = ssub.s32 1, %s4
  %s7 = scalar_select 0, %s6, %s4
  // Predicated region
  $region2: #{rnn_forward_all.1} parent=0 // pred_check
    _
  $region3: #{rnn_forward_all.1} parent=0 // pred_check_branch
    %9 = sbr.rel (0) target = $region5
  $region4: #{rnn_forward_all.1} parent=0 // pred_region
    _
  $region5: #{rnn_forward_all.1} parent=0 // pred_fallthru
    _
  // Predicated region
  $region6: #{rnn_forward_all.1} parent=0 // pred_check
    _
  $region7: #{rnn_forward_all.1} parent=0 // pred_check_branch
    %11 = sbr.rel (0) target = $region9
  $region8: #{rnn_forward_all.1} parent=0 // pred_region
    _
  $region9: #{rnn_forward_all.1} parent=0 // pred_fallthru
    _
  // Predicated region
  $region10: #{rnn_forward_all.1} parent=0 // pred_check
    _
  $region11: #{rnn_forward_all.1} parent=0 // pred_check_branch
    %13 = sbr.rel (0) target = $region13
  $region12: #{rnn_forward_all.1} parent=0 // pred_region
    _
  $region13: #{rnn_forward_all.1} parent=0 // pred_fallthru
    _
  %v15 = vld [vmem:[%s1] sm:$0xf]
  %v16 = vld [vmem:[%s1 + $0x4] sm:$0xf]
  %v17 = vld [vmem:[%s1 + $0x8] sm:$0xf]
  %v18 = vld [vmem:[%s1 + $0xc] sm:$0xf]
  %v19 = vld [vmem:[%s1 + $0x10] sm:$0xf]
  %v20 = vld [vmem:[%s1 + $0x14] sm:$0x3]
  %s21 = scalar_lea.vmem %s1, 32
  %v22 = vld [vmem:[%s21] sm:$0xf]
  %v23 = vld [vmem:[%s21 + $0x4] sm:$0xf]
  %v24 = vld [vmem:[%s21 + $0x8] sm:$0xf]
  %v25 = vld [vmem:[%s21 + $0xc] sm:$0xf]
  %v26 = vld [vmem:[%s21 + $0x10] sm:$0xf]
  %v27 = vld [vmem:[%s21 + $0x14] sm:$0xf]
  %v28 = vld [vmem:[%s21 + $0x18] sm:$0xf]
  %v29 = vld [vmem:[%s21 + $0x1c] sm:$0xf]
  %s30 = scalar_lea.vmem %s1, 64
  %v31 = vld [vmem:[%s30] sm:$0xf]
  %v32 = vld [vmem:[%s30 + $0x4] sm:$0xf]
  %v33 = vld [vmem:[%s30 + $0x8] sm:$0xf]
  %v34 = vld [vmem:[%s30 + $0xc] sm:$0xf]
  %v35 = vld [vmem:[%s2] sm:$0x1]
  %v37 = vlaneseq
  %v38 = vshrl.u32 %v37, 7
  %v39 = vsub.s32 0, %v38
  %v40 = vrot.slane %v35, %v39
  %s42 = scalar_lea.vmem %s2, 1
  %v43 = vld [vmem:[%s42] sm:$0x1]
  %v45 = vlaneseq
  %v46 = vshrl.u32 %v45, 7
  %v47 = vsub.s32 0, %v46
  %v48 = vrot.slane %v43, %v47
  %s50 = scalar_lea.vmem %s2, 2
  %v51 = vld [vmem:[%s50] sm:$0x1]
  %v53 = vlaneseq
  %v54 = vshrl.u32 %v53, 7
  %v55 = vsub.s32 0, %v54
  %v56 = vrot.slane %v51, %v55
  %v58 = vlaneseq
  %v59 = vand.u32 %v58, 127
  %vm60 = vcmp.lt.s32.totalorder %v59, 4
  %v61 = vsel %vm60, 0.0, -inf
  %v62 = vld [vmem:[%s0] sm:$0xff]
  %vm63 = vcmask 97280
  %v64 = vsel %vm63, %v62, 0.0
  %v65 = vpack.c.bf16 %v64, %v64
  %v72 = vunpack.c.l.b16 %v15
  %v73 = vunpack.c.l.b16 %v16
  %v74 = vunpack.c.l.b16 %v17
  %v75 = vunpack.c.l.b16 %v18
  %v76 = vunpack.c.l.b16 %v19
  %v77 = vunpack.c.l.b16 %v20
  %v78 = vpack.c.b16 %v73, %v72
  %v79 = vpack.c.b16 %v75, %v74
  %v80 = vpack.c.b16 %v77, %v76
  %vm83 = vcmask 359424
  %v85 = vsel %vm83, %v65, 0
  %vm87 = vcmask 1045504
  %v89 = vsel %vm87, %v80, 0
  %91 = vmatprep.subr.bf16.mxu0 0
  %92 = vmatpush1.bf16.msra.mxu0 0
  %93 = vmatprep.subr.bf16.mxu0 0
  %94 = vmatpush1.bf16.msra.mxu0 0
  %95 = vmatprep.subr.bf16.mxu0 0
  %96 = vmatpush1.bf16.msra.mxu0 0
  %97 = vmatprep.subr.bf16.mxu0 0
  %98 = vmatpush1.bf16.msra.mxu0 0
  %99 = vmatprep.subr.bf16.mxu0 0
  %100 = vmatpush1.bf16.msra.mxu0 0
  %101 = vmatprep.subr.bf16.mxu0 0
  %102 = vmatpush1.bf16.msra.mxu0 %v89
  %103 = vmatprep.subr.bf16.mxu0 0
  %104 = vmatpush1.bf16.msra.mxu0 %v79
  %105 = vmatprep.subr.bf16.mxu0 0
  %106 = vmatpush1.bf16.msra.mxu0 %v78
  %107 = vmatprep.subr.bf16.mxu0 0
  %108 = vmatpush2.bf16.msra.mxu0 0
  %109 = vmatprep.subr.bf16.mxu0 0
  %110 = vmatpush2.bf16.msra.mxu0 0
  %111 = vmatprep.subr.bf16.mxu0 0
  %112 = vmatpush2.bf16.msra.mxu0 0
  %113 = vmatprep.subr.bf16.mxu0 0
  %114 = vmatpush2.bf16.msra.mxu0 0
  %115 = vmatprep.subr.bf16.mxu0 0
  %116 = vmatpush2.bf16.msra.mxu0 0
  %117 = vmatprep.subr.bf16.mxu0 0
  %118 = vmatpush2.bf16.msra.mxu0 0
  %119 = vmatprep.subr.bf16.mxu0 0
  %120 = vmatpush2.bf16.msra.mxu0 0
  %121 = vmatprep.subr.bf16.mxu0 0
  %122 = vmatpush2.bf16.msra.mxu0 0
  %123 = vmatprep.mubr.bf16.mxu0 0
  %124 = vmatmul.mubr.bf16.gmra.mxu0 %v85
  %v125 = vpop.f32.mrf.mxu0
  %v126 = vadd.f32 %v40, %v125
  %v127 = vpop.f32.mrf.mxu0
  %v128 = vpop.f32.mrf.mxu0
  %v129 = vpop.f32.mrf.mxu0
  %130 = vdwg.mxu0
  %v131 = vtanh.pop %v126
  %vm132 = vcmask 261120
  %v133 = vsel %vm132, %v131, 0.0
  %v134 = vpack.c.bf16 %v133, %v133
  %v143 = vunpack.c.l.b16 %v22
  %v144 = vunpack.c.l.b16 %v23
  %v145 = vunpack.c.l.b16 %v24
  %v146 = vunpack.c.l.b16 %v25
  %v147 = vunpack.c.l.b16 %v26
  %v148 = vunpack.c.l.b16 %v27
  %v149 = vunpack.c.l.b16 %v28
  %v150 = vunpack.c.l.b16 %v29
  %v151 = vpack.c.b16 %v144, %v143
  %v152 = vpack.c.b16 %v146, %v145
  %v153 = vpack.c.b16 %v148, %v147
  %v154 = vpack.c.b16 %v150, %v149
  %vm159 = vcmask 523264
  %v161 = vsel %vm159, %v134, 0
  %163 = vmatprep.subr.bf16.mxu0 0
  %164 = vmatpush1.bf16.msra.mxu0 0
  %165 = vmatprep.subr.bf16.mxu0 0
  %166 = vmatpush1.bf16.msra.mxu0 0
  %167 = vmatprep.subr.bf16.mxu0 0
  %168 = vmatpush1.bf16.msra.mxu0 0
  %169 = vmatprep.subr.bf16.mxu0 0
  %170 = vmatpush1.bf16.msra.mxu0 0
  %171 = vmatprep.subr.bf16.mxu0 0
  %172 = vmatpush1.bf16.msra.mxu0 %v154
  %173 = vmatprep.subr.bf16.mxu0 0
  %174 = vmatpush1.bf16.msra.mxu0 %v153
  %175 = vmatprep.subr.bf16.mxu0 0
  %176 = vmatpush1.bf16.msra.mxu0 %v152
  %177 = vmatprep.subr.bf16.mxu0 0
  %178 = vmatpush1.bf16.msra.mxu0 %v151
  %179 = vmatprep.subr.bf16.mxu0 0
  %180 = vmatpush2.bf16.msra.mxu0 0
  %181 = vmatprep.subr.bf16.mxu0 0
  %182 = vmatpush2.bf16.msra.mxu0 0
  %183 = vmatprep.subr.bf16.mxu0 0
  %184 = vmatpush2.bf16.msra.mxu0 0
  %185 = vmatprep.subr.bf16.mxu0 0
  %186 = vmatpush2.bf16.msra.mxu0 0
  %187 = vmatprep.subr.bf16.mxu0 0
  %188 = vmatpush2.bf16.msra.mxu0 0
  %189 = vmatprep.subr.bf16.mxu0 0
  %190 = vmatpush2.bf16.msra.mxu0 0
  %191 = vmatprep.subr.bf16.mxu0 0
  %192 = vmatpush2.bf16.msra.mxu0 0
  %193 = vmatprep.subr.bf16.mxu0 0
  %194 = vmatpush2.bf16.msra.mxu0 0
  %195 = vmatprep.mubr.bf16.mxu0 0
  %196 = vmatmul.mubr.bf16.gmra.mxu0 %v161
  %v197 = vpop.f32.mrf.mxu0
  %v198 = vadd.f32 %v48, %v197
  %v199 = vpop.f32.mrf.mxu0
  %v200 = vpop.f32.mrf.mxu0
  %v201 = vpop.f32.mrf.mxu0
  %202 = vdwg.mxu0
  %v203 = vtanh.pop %v198
  %v204 = vpack.c.bf16 %v203, %v203
  %v209 = vunpack.c.l.b16 %v31
  %v210 = vunpack.c.l.b16 %v32
  %v211 = vunpack.c.l.b16 %v33
  %v212 = vunpack.c.l.b16 %v34
  %v213 = vpack.c.b16 %v210, %v209
  %v214 = vpack.c.b16 %v212, %v211
  %v218 = vsel %vm132, %v204, 0
  %220 = vmatprep.subr.bf16.mxu0 0
  %221 = vmatpush1.bf16.msra.mxu0 0
  %222 = vmatprep.subr.bf16.mxu0 0
  %223 = vmatpush1.bf16.msra.mxu0 0
  %224 = vmatprep.subr.bf16.mxu0 0
  %225 = vmatpush1.bf16.msra.mxu0 0
  %226 = vmatprep.subr.bf16.mxu0 0
  %227 = vmatpush1.bf16.msra.mxu0 0
  %228 = vmatprep.subr.bf16.mxu0 0
  %229 = vmatpush1.bf16.msra.mxu0 0
  %230 = vmatprep.subr.bf16.mxu0 0
  %231 = vmatpush1.bf16.msra.mxu0 0
  %232 = vmatprep.subr.bf16.mxu0 0
  %233 = vmatpush1.bf16.msra.mxu0 %v214
  %234 = vmatprep.subr.bf16.mxu0 0
  %235 = vmatpush1.bf16.msra.mxu0 %v213
  %236 = vmatprep.subr.bf16.mxu0 0
  %237 = vmatpush2.bf16.msra.mxu0 0
  %238 = vmatprep.subr.bf16.mxu0 0
  %239 = vmatpush2.bf16.msra.mxu0 0
  %240 = vmatprep.subr.bf16.mxu0 0
  %241 = vmatpush2.bf16.msra.mxu0 0
  %242 = vmatprep.subr.bf16.mxu0 0
  %243 = vmatpush2.bf16.msra.mxu0 0
  %244 = vmatprep.subr.bf16.mxu0 0
  %245 = vmatpush2.bf16.msra.mxu0 0
  %246 = vmatprep.subr.bf16.mxu0 0
  %247 = vmatpush2.bf16.msra.mxu0 0
  %248 = vmatprep.subr.bf16.mxu0 0
  %249 = vmatpush2.bf16.msra.mxu0 0
  %250 = vmatprep.subr.bf16.mxu0 0
  %251 = vmatpush2.bf16.msra.mxu0 0
  %252 = vmatprep.mubr.bf16.mxu0 0
  %253 = vmatmul.mubr.bf16.gmra.mxu0 %v218
  %v254 = vpop.f32.mrf.mxu0
  %v255 = vadd.f32 %v56, %v254
  %v256 = vpop.f32.mrf.mxu0
  %v257 = vpop.f32.mrf.mxu0
  %v258 = vpop.f32.mrf.mxu0
  %259 = vdwg.mxu0
  %v260 = vadd.f32 %v255, %v61
  %v261 = vsel %vm63, %v260, -inf
  %262 = vmax.xlane.f32.xlu0 %v261
  %v263 = vpop.xlane.xlu0 %262
  %v264 = vsub.f32 %v260, %v263
  %v265 = vmul.f32 %v264, 1.442695
  %v266 = vpow.pop %v265
  %v267 = vsel %vm63, %v266, 0.0
  %268 = vadd.xlane.f32.xlu0 %v267
  %v269 = vpop.xlane.xlu0 %268
  %v270 = vrcp.pop %v269
  %v271 = vmul.f32 %v266, %v270
  %v272 = vadd.f32 %v255, %v62
  %v273 = vsel %vm60, %v271, %v272
  %275 = vrot.lane.b32.xlu0 %v203, 12
  %v276 = vpop.permute.xlu0 %275
  %v278 = vsel %vm63, %v273, %v276
  %279 = vst.msk [vmem:[%s3] sm:$0xff] %vm83, %v278
  %s280 = scalar_lea.vmem %s0, 8
  %v281 = vld [vmem:[%s280] sm:$0xff]
  %vm282 = vcmp.ne.f32.partialorder %v281, %v281
  %v283 = vsel %vm282, %v273, %v281
  %285 = vrot.lane.b32.xlu0 %v131, 12
  %v286 = vpop.permute.xlu0 %285
  %v288 = vsel %vm63, %v283, %v286
  %v289 = vpack.c.bf16 %v288, %v288
  %v291 = vsel %vm83, %v289, 0
  %293 = vmatprep.subr.bf16.mxu0 0
  %294 = vmatpush1.bf16.msra.mxu0 0
  %295 = vmatprep.subr.bf16.mxu0 0
  %296 = vmatpush1.bf16.msra.mxu0 0
  %297 = vmatprep.subr.bf16.mxu0 0
  %298 = vmatpush1.bf16.msra.mxu0 0
  %299 = vmatprep.subr.bf16.mxu0 0
  %300 = vmatpush1.bf16.msra.mxu0 0
  %301 = vmatprep.subr.bf16.mxu0 0
  %302 = vmatpush1.bf16.msra.mxu0 0
  %303 = vmatprep.subr.bf16.mxu0 0
  %304 = vmatpush1.bf16.msra.mxu0 %v89
  %305 = vmatprep.subr.bf16.mxu0 0
  %306 = vmatpush1.bf16.msra.mxu0 %v79
  %307 = vmatprep.subr.bf16.mxu0 0
  %308 = vmatpush1.bf16.msra.mxu0 %v78
  %309 = vmatprep.subr.bf16.mxu0 0
  %310 = vmatpush2.bf16.msra.mxu0 0
  %311 = vmatprep.subr.bf16.mxu0 0
  %312 = vmatpush2.bf16.msra.mxu0 0
  %313 = vmatprep.subr.bf16.mxu0 0
  %314 = vmatpush2.bf16.msra.mxu0 0
  %315 = vmatprep.subr.bf16.mxu0 0
  %316 = vmatpush2.bf16.msra.mxu0 0
  %317 = vmatprep.subr.bf16.mxu0 0
  %318 = vmatpush2.bf16.msra.mxu0 0
  %319 = vmatprep.subr.bf16.mxu0 0
  %320 = vmatpush2.bf16.msra.mxu0 0
  %321 = vmatprep.subr.bf16.mxu0 0
  %322 = vmatpush2.bf16.msra.mxu0 0
  %323 = vmatprep.subr.bf16.mxu0 0
  %324 = vmatpush2.bf16.msra.mxu0 0
  %325 = vmatprep.mubr.bf16.mxu0 0
  %326 = vmatmul.mubr.bf16.gmra.mxu0 %v291
  %v327 = vpop.f32.mrf.mxu0
  %v328 = vadd.f32 %v40, %v327
  %v329 = vpop.f32.mrf.mxu0
  %v330 = vpop.f32.mrf.mxu0
  %v331 = vpop.f32.mrf.mxu0
  %332 = vdwg.mxu0
  %v333 = vtanh.pop %v328
  %334 = vrot.lane.b32.xlu0 %v203, 32
  %v335 = vpop.permute.xlu0 %334
  %v337 = vsel %vm132, %v333, %v335
  %v338 = vpack.c.bf16 %v337, %v337
  %v340 = vsel %vm159, %v338, 0
  %342 = vmatprep.subr.bf16.mxu0 0
  %343 = vmatpush1.bf16.msra.mxu0 0
  %344 = vmatprep.subr.bf16.mxu0 0
  %345 = vmatpush1.bf16.msra.mxu0 0
  %346 = vmatprep.subr.bf16.mxu0 0
  %347 = vmatpush1.bf16.msra.mxu0 0
  %348 = vmatprep.subr.bf16.mxu0 0
  %349 = vmatpush1.bf16.msra.mxu0 0
  %350 = vmatprep.subr.bf16.mxu0 0
  %351 = vmatpush1.bf16.msra.mxu0 %v154
  %352 = vmatprep.subr.bf16.mxu0 0
  %353 = vmatpush1.bf16.msra.mxu0 %v153
  %354 = vmatprep.subr.bf16.mxu0 0
  %355 = vmatpush1.bf16.msra.mxu0 %v152
  %356 = vmatprep.subr.bf16.mxu0 0
  %357 = vmatpush1.bf16.msra.mxu0 %v151
  %358 = vmatprep.subr.bf16.mxu0 0
  %359 = vmatpush2.bf16.msra.mxu0 0
  %360 = vmatprep.subr.bf16.mxu0 0
  %361 = vmatpush2.bf16.msra.mxu0 0
  %362 = vmatprep.subr.bf16.mxu0 0
  %363 = vmatpush2.bf16.msra.mxu0 0
  %364 = vmatprep.subr.bf16.mxu0 0
  %365 = vmatpush2.bf16.msra.mxu0 0
  %366 = vmatprep.subr.bf16.mxu0 0
  %367 = vmatpush2.bf16.msra.mxu0 0
  %368 = vmatprep.subr.bf16.mxu0 0
  %369 = vmatpush2.bf16.msra.mxu0 0
  %370 = vmatprep.subr.bf16.mxu0 0
  %371 = vmatpush2.bf16.msra.mxu0 0
  %372 = vmatprep.subr.bf16.mxu0 0
  %373 = vmatpush2.bf16.msra.mxu0 0
  %374 = vmatprep.mubr.bf16.mxu0 0
  %375 = vmatmul.mubr.bf16.gmra.mxu0 %v340
  %v376 = vpop.f32.mrf.mxu0
  %v377 = vadd.f32 %v48, %v376
  %v378 = vpop.f32.mrf.mxu0
  %v379 = vpop.f32.mrf.mxu0
  %v380 = vpop.f32.mrf.mxu0
  %381 = vdwg.mxu0
  %v382 = vtanh.pop %v377
  %v383 = vpack.c.bf16 %v382, %v382
  %v385 = vsel %vm132, %v383, 0
  %387 = vmatprep.subr.bf16.mxu0 0
  %388 = vmatpush1.bf16.msra.mxu0 0
  %389 = vmatprep.subr.bf16.mxu0 0
  %390 = vmatpush1.bf16.msra.mxu0 0
  %391 = vmatprep.subr.bf16.mxu0 0
  %392 = vmatpush1.bf16.msra.mxu0 0
  %393 = vmatprep.subr.bf16.mxu0 0
  %394 = vmatpush1.bf16.msra.mxu0 0
  %395 = vmatprep.subr.bf16.mxu0 0
  %396 = vmatpush1.bf16.msra.mxu0 0
  %397 = vmatprep.subr.bf16.mxu0 0
  %398 = vmatpush1.bf16.msra.mxu0 0
  %399 = vmatprep.subr.bf16.mxu0 0
  %400 = vmatpush1.bf16.msra.mxu0 %v214
  %401 = vmatprep.subr.bf16.mxu0 0
  %402 = vmatpush1.bf16.msra.mxu0 %v213
  %403 = vmatprep.subr.bf16.mxu0 0
  %404 = vmatpush2.bf16.msra.mxu0 0
  %405 = vmatprep.subr.bf16.mxu0 0
  %406 = vmatpush2.bf16.msra.mxu0 0
  %407 = vmatprep.subr.bf16.mxu0 0
  %408 = vmatpush2.bf16.msra.mxu0 0
  %409 = vmatprep.subr.bf16.mxu0 0
  %410 = vmatpush2.bf16.msra.mxu0 0
  %411 = vmatprep.subr.bf16.mxu0 0
  %412 = vmatpush2.bf16.msra.mxu0 0
  %413 = vmatprep.subr.bf16.mxu0 0
  %414 = vmatpush2.bf16.msra.mxu0 0
  %415 = vmatprep.subr.bf16.mxu0 0
  %416 = vmatpush2.bf16.msra.mxu0 0
  %417 = vmatprep.subr.bf16.mxu0 0
  %418 = vmatpush2.bf16.msra.mxu0 0
  %419 = vmatprep.mubr.bf16.mxu0 0
  %420 = vmatmul.mubr.bf16.gmra.mxu0 %v385
  %v421 = vpop.f32.mrf.mxu0
  %v422 = vadd.f32 %v56, %v421
  %v423 = vpop.f32.mrf.mxu0
  %v424 = vpop.f32.mrf.mxu0
  %v425 = vpop.f32.mrf.mxu0
  %426 = vdwg.mxu0
  %v427 = vadd.f32 %v422, %v61
  %v428 = vsel %vm63, %v427, -inf
  %429 = vmax.xlane.f32.xlu0 %v428
  %v430 = vpop.xlane.xlu0 %429
  %v431 = vsub.f32 %v427, %v430
  %v432 = vmul.f32 %v431, 1.442695
  %v433 = vpow.pop %v432
  %v434 = vsel %vm63, %v433, 0.0
  %435 = vadd.xlane.f32.xlu0 %v434
  %v436 = vpop.xlane.xlu0 %435
  %v437 = vrcp.pop %v436
  %v438 = vmul.f32 %v433, %v437
  %v439 = vadd.f32 %v422, %v283
  %v440 = vsel %vm60, %v438, %v439
  %442 = vrot.lane.b32.xlu0 %v382, 12
  %v443 = vpop.permute.xlu0 %442
  %v445 = vsel %vm63, %v440, %v443
  %s446 = scalar_lea.vmem %s3, 8
  %447 = vst.msk [vmem:[%s446] sm:$0xff] %vm83, %v445
  %s448 = scalar_lea.vmem %s0, 16
  %v449 = vld [vmem:[%s448] sm:$0xff]
  %vm450 = vcmp.ne.f32.partialorder %v449, %v449
  %v451 = vsel %vm450, %v440, %v449
  %453 = vrot.lane.b32.xlu0 %v333, 12
  %v454 = vpop.permute.xlu0 %453
  %v456 = vsel %vm63, %v451, %v454
  %v457 = vpack.c.bf16 %v456, %v456
  %v459 = vsel %vm83, %v457, 0
  %461 = vmatprep.subr.bf16.mxu0 0
  %462 = vmatpush1.bf16.msra.mxu0 0
  %463 = vmatprep.subr.bf16.mxu0 0
  %464 = vmatpush1.bf16.msra.mxu0 0
  %465 = vmatprep.subr.bf16.mxu0 0
  %466 = vmatpush1.bf16.msra.mxu0 0
  %467 = vmatprep.subr.bf16.mxu0 0
  %468 = vmatpush1.bf16.msra.mxu0 0
  %469 = vmatprep.subr.bf16.mxu0 0
  %470 = vmatpush1.bf16.msra.mxu0 0
  %471 = vmatprep.subr.bf16.mxu0 0
  %472 = vmatpush1.bf16.msra.mxu0 %v89
  %473 = vmatprep.subr.bf16.mxu0 0
  %474 = vmatpush1.bf16.msra.mxu0 %v79
  %475 = vmatprep.subr.bf16.mxu0 0
  %476 = vmatpush1.bf16.msra.mxu0 %v78
  %477 = vmatprep.subr.bf16.mxu0 0
  %478 = vmatpush2.bf16.msra.mxu0 0
  %479 = vmatprep.subr.bf16.mxu0 0
  %480 = vmatpush2.bf16.msra.mxu0 0
  %481 = vmatprep.subr.bf16.mxu0 0
  %482 = vmatpush2.bf16.msra.mxu0 0
  %483 = vmatprep.subr.bf16.mxu0 0
  %484 = vmatpush2.bf16.msra.mxu0 0
  %485 = vmatprep.subr.bf16.mxu0 0
  %486 = vmatpush2.bf16.msra.mxu0 0
  %487 = vmatprep.subr.bf16.mxu0 0
  %488 = vmatpush2.bf16.msra.mxu0 0
  %489 = vmatprep.subr.bf16.mxu0 0
  %490 = vmatpush2.bf16.msra.mxu0 0
  %491 = vmatprep.subr.bf16.mxu0 0
  %492 = vmatpush2.bf16.msra.mxu0 0
  %493 = vmatprep.mubr.bf16.mxu0 0
  %494 = vmatmul.mubr.bf16.gmra.mxu0 %v459
  %v495 = vpop.f32.mrf.mxu0
  %v496 = vadd.f32 %v40, %v495
  %v497 = vpop.f32.mrf.mxu0
  %v498 = vpop.f32.mrf.mxu0
  %v499 = vpop.f32.mrf.mxu0
  %500 = vdwg.mxu0
  %v501 = vtanh.pop %v496
  %502 = vrot.lane.b32.xlu0 %v382, 32
  %v503 = vpop.permute.xlu0 %502
  %v505 = vsel %vm132, %v501, %v503
  %v506 = vpack.c.bf16 %v505, %v505
  %v508 = vsel %vm159, %v506, 0
  %510 = vmatprep.subr.bf16.mxu0 0
  %511 = vmatpush1.bf16.msra.mxu0 0
  %512 = vmatprep.subr.bf16.mxu0 0
  %513 = vmatpush1.bf16.msra.mxu0 0
  %514 = vmatprep.subr.bf16.mxu0 0
  %515 = vmatpush1.bf16.msra.mxu0 0
  %516 = vmatprep.subr.bf16.mxu0 0
  %517 = vmatpush1.bf16.msra.mxu0 0
  %518 = vmatprep.subr.bf16.mxu0 0
  %519 = vmatpush1.bf16.msra.mxu0 %v154
  %520 = vmatprep.subr.bf16.mxu0 0
  %521 = vmatpush1.bf16.msra.mxu0 %v153
  %522 = vmatprep.subr.bf16.mxu0 0
  %523 = vmatpush1.bf16.msra.mxu0 %v152
  %524 = vmatprep.subr.bf16.mxu0 0
  %525 = vmatpush1.bf16.msra.mxu0 %v151
  %526 = vmatprep.subr.bf16.mxu0 0
  %527 = vmatpush2.bf16.msra.mxu0 0
  %528 = vmatprep.subr.bf16.mxu0 0
  %529 = vmatpush2.bf16.msra.mxu0 0
  %530 = vmatprep.subr.bf16.mxu0 0
  %531 = vmatpush2.bf16.msra.mxu0 0
  %532 = vmatprep.subr.bf16.mxu0 0
  %533 = vmatpush2.bf16.msra.mxu0 0
  %534 = vmatprep.subr.bf16.mxu0 0
  %535 = vmatpush2.bf16.msra.mxu0 0
  %536 = vmatprep.subr.bf16.mxu0 0
  %537 = vmatpush2.bf16.msra.mxu0 0
  %538 = vmatprep.subr.bf16.mxu0 0
  %539 = vmatpush2.bf16.msra.mxu0 0
  %540 = vmatprep.subr.bf16.mxu0 0
  %541 = vmatpush2.bf16.msra.mxu0 0
  %542 = vmatprep.mubr.bf16.mxu0 0
  %543 = vmatmul.mubr.bf16.gmra.mxu0 %v508
  %v544 = vpop.f32.mrf.mxu0
  %v545 = vadd.f32 %v48, %v544
  %v546 = vpop.f32.mrf.mxu0
  %v547 = vpop.f32.mrf.mxu0
  %v548 = vpop.f32.mrf.mxu0
  %549 = vdwg.mxu0
  %v550 = vtanh.pop %v545
  %v551 = vpack.c.bf16 %v550, %v550
  %v553 = vsel %vm132, %v551, 0
  %555 = vmatprep.subr.bf16.mxu0 0
  %556 = vmatpush1.bf16.msra.mxu0 0
  %557 = vmatprep.subr.bf16.mxu0 0
  %558 = vmatpush1.bf16.msra.mxu0 0
  %559 = vmatprep.subr.bf16.mxu0 0
  %560 = vmatpush1.bf16.msra.mxu0 0
  %561 = vmatprep.subr.bf16.mxu0 0
  %562 = vmatpush1.bf16.msra.mxu0 0
  %563 = vmatprep.subr.bf16.mxu0 0
  %564 = vmatpush1.bf16.msra.mxu0 0
  %565 = vmatprep.subr.bf16.mxu0 0
  %566 = vmatpush1.bf16.msra.mxu0 0
  %567 = vmatprep.subr.bf16.mxu0 0
  %568 = vmatpush1.bf16.msra.mxu0 %v214
  %569 = vmatprep.subr.bf16.mxu0 0
  %570 = vmatpush1.bf16.msra.mxu0 %v213
  %571 = vmatprep.subr.bf16.mxu0 0
  %572 = vmatpush2.bf16.msra.mxu0 0
  %573 = vmatprep.subr.bf16.mxu0 0
  %574 = vmatpush2.bf16.msra.mxu0 0
  %575 = vmatprep.subr.bf16.mxu0 0
  %576 = vmatpush2.bf16.msra.mxu0 0
  %577 = vmatprep.subr.bf16.mxu0 0
  %578 = vmatpush2.bf16.msra.mxu0 0
  %579 = vmatprep.subr.bf16.mxu0 0
  %580 = vmatpush2.bf16.msra.mxu0 0
  %581 = vmatprep.subr.bf16.mxu0 0
  %582 = vmatpush2.bf16.msra.mxu0 0
  %583 = vmatprep.subr.bf16.mxu0 0
  %584 = vmatpush2.bf16.msra.mxu0 0
  %585 = vmatprep.subr.bf16.mxu0 0
  %586 = vmatpush2.bf16.msra.mxu0 0
  %587 = vmatprep.mubr.bf16.mxu0 0
  %588 = vmatmul.mubr.bf16.gmra.mxu0 %v553
  %v589 = vpop.f32.mrf.mxu0
  %v590 = vadd.f32 %v56, %v589
  %v591 = vpop.f32.mrf.mxu0
  %v592 = vpop.f32.mrf.mxu0
  %v593 = vpop.f32.mrf.mxu0
  %594 = vdwg.mxu0
  %v595 = vadd.f32 %v590, %v61
  %v596 = vsel %vm63, %v595, -inf
  %597 = vmax.xlane.f32.xlu0 %v596
  %v598 = vpop.xlane.xlu0 %597
  %v599 = vsub.f32 %v595, %v598
  %v600 = vmul.f32 %v599, 1.442695
  %v601 = vpow.pop %v600
  %v602 = vsel %vm63, %v601, 0.0
  %603 = vadd.xlane.f32.xlu0 %v602
  %v604 = vpop.xlane.xlu0 %603
  %v605 = vrcp.pop %v604
  %v606 = vmul.f32 %v601, %v605
  %v607 = vadd.f32 %v590, %v451
  %v608 = vsel %vm60, %v606, %v607
  %610 = vrot.lane.b32.xlu0 %v550, 12
  %v611 = vpop.permute.xlu0 %610
  %v613 = vsel %vm63, %v608, %v611
  %s614 = scalar_lea.vmem %s3, 16
  %615 = vst.msk [vmem:[%s614] sm:$0xff] %vm83, %v613
  %s616 = scalar_lea.vmem %s0, 24
  %v617 = vld [vmem:[%s616] sm:$0xff]
  %vm618 = vcmp.ne.f32.partialorder %v617, %v617
  %v619 = vsel %vm618, %v608, %v617
  %621 = vrot.lane.b32.xlu0 %v501, 12
  %v622 = vpop.permute.xlu0 %621
  %v624 = vsel %vm63, %v619, %v622
  %v625 = vpack.c.bf16 %v624, %v624
  %v627 = vsel %vm83, %v625, 0
  %629 = vmatprep.subr.bf16.mxu0 0
  %630 = vmatpush1.bf16.msra.mxu0 0
  %631 = vmatprep.subr.bf16.mxu0 0
  %632 = vmatpush1.bf16.msra.mxu0 0
  %633 = vmatprep.subr.bf16.mxu0 0
  %634 = vmatpush1.bf16.msra.mxu0 0
  %635 = vmatprep.subr.bf16.mxu0 0
  %636 = vmatpush1.bf16.msra.mxu0 0
  %637 = vmatprep.subr.bf16.mxu0 0
  %638 = vmatpush1.bf16.msra.mxu0 0
  %639 = vmatprep.subr.bf16.mxu0 0
  %640 = vmatpush1.bf16.msra.mxu0 %v89
  %641 = vmatprep.subr.bf16.mxu0 0
  %642 = vmatpush1.bf16.msra.mxu0 %v79
  %643 = vmatprep.subr.bf16.mxu0 0
  %644 = vmatpush1.bf16.msra.mxu0 %v78
  %645 = vmatprep.subr.bf16.mxu0 0
  %646 = vmatpush2.bf16.msra.mxu0 0
  %647 = vmatprep.subr.bf16.mxu0 0
  %648 = vmatpush2.bf16.msra.mxu0 0
  %649 = vmatprep.subr.bf16.mxu0 0
  %650 = vmatpush2.bf16.msra.mxu0 0
  %651 = vmatprep.subr.bf16.mxu0 0
  %652 = vmatpush2.bf16.msra.mxu0 0
  %653 = vmatprep.subr.bf16.mxu0 0
  %654 = vmatpush2.bf16.msra.mxu0 0
  %655 = vmatprep.subr.bf16.mxu0 0
  %656 = vmatpush2.bf16.msra.mxu0 0
  %657 = vmatprep.subr.bf16.mxu0 0
  %658 = vmatpush2.bf16.msra.mxu0 0
  %659 = vmatprep.subr.bf16.mxu0 0
  %660 = vmatpush2.bf16.msra.mxu0 0
  %661 = vmatprep.mubr.bf16.mxu0 0
  %662 = vmatmul.mubr.bf16.gmra.mxu0 %v627
  %v663 = vpop.f32.mrf.mxu0
  %v664 = vadd.f32 %v40, %v663
  %v665 = vpop.f32.mrf.mxu0
  %v666 = vpop.f32.mrf.mxu0
  %v667 = vpop.f32.mrf.mxu0
  %668 = vdwg.mxu0
  %v669 = vtanh.pop %v664
  %670 = vrot.lane.b32.xlu0 %v550, 32
  %v671 = vpop.permute.xlu0 %670
  %v673 = vsel %vm132, %v669, %v671
  %v674 = vpack.c.bf16 %v673, %v673
  %v676 = vsel %vm159, %v674, 0
  %678 = vmatprep.subr.bf16.mxu0 0
  %679 = vmatpush1.bf16.msra.mxu0 0
  %680 = vmatprep.subr.bf16.mxu0 0
  %681 = vmatpush1.bf16.msra.mxu0 0
  %682 = vmatprep.subr.bf16.mxu0 0
  %683 = vmatpush1.bf16.msra.mxu0 0
  %684 = vmatprep.subr.bf16.mxu0 0
  %685 = vmatpush1.bf16.msra.mxu0 0
  %686 = vmatprep.subr.bf16.mxu0 0
  %687 = vmatpush1.bf16.msra.mxu0 %v154
  %688 = vmatprep.subr.bf16.mxu0 0
  %689 = vmatpush1.bf16.msra.mxu0 %v153
  %690 = vmatprep.subr.bf16.mxu0 0
  %691 = vmatpush1.bf16.msra.mxu0 %v152
  %692 = vmatprep.subr.bf16.mxu0 0
  %693 = vmatpush1.bf16.msra.mxu0 %v151
  %694 = vmatprep.subr.bf16.mxu0 0
  %695 = vmatpush2.bf16.msra.mxu0 0
  %696 = vmatprep.subr.bf16.mxu0 0
  %697 = vmatpush2.bf16.msra.mxu0 0
  %698 = vmatprep.subr.bf16.mxu0 0
  %699 = vmatpush2.bf16.msra.mxu0 0
  %700 = vmatprep.subr.bf16.mxu0 0
  %701 = vmatpush2.bf16.msra.mxu0 0
  %702 = vmatprep.subr.bf16.mxu0 0
  %703 = vmatpush2.bf16.msra.mxu0 0
  %704 = vmatprep.subr.bf16.mxu0 0
  %705 = vmatpush2.bf16.msra.mxu0 0
  %706 = vmatprep.subr.bf16.mxu0 0
  %707 = vmatpush2.bf16.msra.mxu0 0
  %708 = vmatprep.subr.bf16.mxu0 0
  %709 = vmatpush2.bf16.msra.mxu0 0
  %710 = vmatprep.mubr.bf16.mxu0 0
  %711 = vmatmul.mubr.bf16.gmra.mxu0 %v676
  %v712 = vpop.f32.mrf.mxu0
  %v713 = vadd.f32 %v48, %v712
  %v714 = vpop.f32.mrf.mxu0
  %v715 = vpop.f32.mrf.mxu0
  %v716 = vpop.f32.mrf.mxu0
  %717 = vdwg.mxu0
  %v718 = vtanh.pop %v713
  %v719 = vpack.c.bf16 %v718, %v718
  %v721 = vsel %vm132, %v719, 0
  %723 = vmatprep.subr.bf16.mxu0 0
  %724 = vmatpush1.bf16.msra.mxu0 0
  %725 = vmatprep.subr.bf16.mxu0 0
  %726 = vmatpush1.bf16.msra.mxu0 0
  %727 = vmatprep.subr.bf16.mxu0 0
  %728 = vmatpush1.bf16.msra.mxu0 0
  %729 = vmatprep.subr.bf16.mxu0 0
  %730 = vmatpush1.bf16.msra.mxu0 0
  %731 = vmatprep.subr.bf16.mxu0 0
  %732 = vmatpush1.bf16.msra.mxu0 0
  %733 = vmatprep.subr.bf16.mxu0 0
  %734 = vmatpush1.bf16.msra.mxu0 0
  %735 = vmatprep.subr.bf16.mxu0 0
  %736 = vmatpush1.bf16.msra.mxu0 %v214
  %737 = vmatprep.subr.bf16.mxu0 0
  %738 = vmatpush1.bf16.msra.mxu0 %v213
  %739 = vmatprep.subr.bf16.mxu0 0
  %740 = vmatpush2.bf16.msra.mxu0 0
  %741 = vmatprep.subr.bf16.mxu0 0
  %742 = vmatpush2.bf16.msra.mxu0 0
  %743 = vmatprep.subr.bf16.mxu0 0
  %744 = vmatpush2.bf16.msra.mxu0 0
  %745 = vmatprep.subr.bf16.mxu0 0
  %746 = vmatpush2.bf16.msra.mxu0 0
  %747 = vmatprep.subr.bf16.mxu0 0
  %748 = vmatpush2.bf16.msra.mxu0 0
  %749 = vmatprep.subr.bf16.mxu0 0
  %750 = vmatpush2.bf16.msra.mxu0 0
  %751 = vmatprep.subr.bf16.mxu0 0
  %752 = vmatpush2.bf16.msra.mxu0 0
  %753 = vmatprep.subr.bf16.mxu0 0
  %754 = vmatpush2.bf16.msra.mxu0 0
  %755 = vmatprep.mubr.bf16.mxu0 0
  %756 = vmatmul.mubr.bf16.gmra.mxu0 %v721
  %v757 = vpop.f32.mrf.mxu0
  %v758 = vadd.f32 %v56, %v757
  %v759 = vpop.f32.mrf.mxu0
  %v760 = vpop.f32.mrf.mxu0
  %v761 = vpop.f32.mrf.mxu0
  %762 = vdwg.mxu0
  %v763 = vadd.f32 %v758, %v61
  %v764 = vsel %vm63, %v763, -inf
  %765 = vmax.xlane.f32.xlu0 %v764
  %v766 = vpop.xlane.xlu0 %765
  %v767 = vsub.f32 %v763, %v766
  %v768 = vmul.f32 %v767, 1.442695
  %v769 = vpow.pop %v768
  %v770 = vsel %vm63, %v769, 0.0
  %771 = vadd.xlane.f32.xlu0 %v770
  %v772 = vpop.xlane.xlu0 %771
  %v773 = vrcp.pop %v772
  %v774 = vmul.f32 %v769, %v773
  %v775 = vadd.f32 %v758, %v619
  %v776 = vsel %vm60, %v774, %v775
  %778 = vrot.lane.b32.xlu0 %v718, 12
  %v779 = vpop.permute.xlu0 %778
  %v781 = vsel %vm63, %v776, %v779
  %s782 = scalar_lea.vmem %s3, 24
  %783 = vst.msk [vmem:[%s782] sm:$0xff] %vm83, %v781
  %s784 = scalar_lea.vmem %s0, 32
  %v785 = vld [vmem:[%s784] sm:$0xff]
  %vm786 = vcmp.ne.f32.partialorder %v785, %v785
  %v787 = vsel %vm786, %v776, %v785
  %789 = vrot.lane.b32.xlu0 %v669, 12
  %v790 = vpop.permute.xlu0 %789
  %v792 = vsel %vm63, %v787, %v790
  %v793 = vpack.c.bf16 %v792, %v792
  %v795 = vsel %vm83, %v793, 0
  %797 = vmatprep.subr.bf16.mxu0 0
  %798 = vmatpush1.bf16.msra.mxu0 0
  %799 = vmatprep.subr.bf16.mxu0 0
  %800 = vmatpush1.bf16.msra.mxu0 0
  %801 = vmatprep.subr.bf16.mxu0 0
  %802 = vmatpush1.bf16.msra.mxu0 0
  %803 = vmatprep.subr.bf16.mxu0 0
  %804 = vmatpush1.bf16.msra.mxu0 0
  %805 = vmatprep.subr.bf16.mxu0 0
  %806 = vmatpush1.bf16.msra.mxu0 0
  %807 = vmatprep.subr.bf16.mxu0 0
  %808 = vmatpush1.bf16.msra.mxu0 %v89
  %809 = vmatprep.subr.bf16.mxu0 0
  %810 = vmatpush1.bf16.msra.mxu0 %v79
  %811 = vmatprep.subr.bf16.mxu0 0
  %812 = vmatpush1.bf16.msra.mxu0 %v78
  %813 = vmatprep.subr.bf16.mxu0 0
  %814 = vmatpush2.bf16.msra.mxu0 0
  %815 = vmatprep.subr.bf16.mxu0 0
  %816 = vmatpush2.bf16.msra.mxu0 0
  %817 = vmatprep.subr.bf16.mxu0 0
  %818 = vmatpush2.bf16.msra.mxu0 0
  %819 = vmatprep.subr.bf16.mxu0 0
  %820 = vmatpush2.bf16.msra.mxu0 0
  %821 = vmatprep.subr.bf16.mxu0 0
  %822 = vmatpush2.bf16.msra.mxu0 0
  %823 = vmatprep.subr.bf16.mxu0 0
  %824 = vmatpush2.bf16.msra.mxu0 0
  %825 = vmatprep.subr.bf16.mxu0 0
  %826 = vmatpush2.bf16.msra.mxu0 0
  %827 = vmatprep.subr.bf16.mxu0 0
  %828 = vmatpush2.bf16.msra.mxu0 0
  %829 = vmatprep.mubr.bf16.mxu0 0
  %830 = vmatmul.mubr.bf16.gmra.mxu0 %v795
  %v831 = vpop.f32.mrf.mxu0
  %v832 = vadd.f32 %v40, %v831
  %v833 = vpop.f32.mrf.mxu0
  %v834 = vpop.f32.mrf.mxu0
  %v835 = vpop.f32.mrf.mxu0
  %836 = vdwg.mxu0
  %v837 = vtanh.pop %v832
  %838 = vrot.lane.b32.xlu0 %v718, 32
  %v839 = vpop.permute.xlu0 %838
  %v841 = vsel %vm132, %v837, %v839
  %v842 = vpack.c.bf16 %v841, %v841
  %v844 = vsel %vm159, %v842, 0
  %846 = vmatprep.subr.bf16.mxu0 0
  %847 = vmatpush1.bf16.msra.mxu0 0
  %848 = vmatprep.subr.bf16.mxu0 0
  %849 = vmatpush1.bf16.msra.mxu0 0
  %850 = vmatprep.subr.bf16.mxu0 0
  %851 = vmatpush1.bf16.msra.mxu0 0
  %852 = vmatprep.subr.bf16.mxu0 0
  %853 = vmatpush1.bf16.msra.mxu0 0
  %854 = vmatprep.subr.bf16.mxu0 0
  %855 = vmatpush1.bf16.msra.mxu0 %v154
  %856 = vmatprep.subr.bf16.mxu0 0
  %857 = vmatpush1.bf16.msra.mxu0 %v153
  %858 = vmatprep.subr.bf16.mxu0 0
  %859 = vmatpush1.bf16.msra.mxu0 %v152
  %860 = vmatprep.subr.bf16.mxu0 0
  %861 = vmatpush1.bf16.msra.mxu0 %v151
  %862 = vmatprep.subr.bf16.mxu0 0
  %863 = vmatpush2.bf16.msra.mxu0 0
  %864 = vmatprep.subr.bf16.mxu0 0
  %865 = vmatpush2.bf16.msra.mxu0 0
  %866 = vmatprep.subr.bf16.mxu0 0
  %867 = vmatpush2.bf16.msra.mxu0 0
  %868 = vmatprep.subr.bf16.mxu0 0
  %869 = vmatpush2.bf16.msra.mxu0 0
  %870 = vmatprep.subr.bf16.mxu0 0
  %871 = vmatpush2.bf16.msra.mxu0 0
  %872 = vmatprep.subr.bf16.mxu0 0
  %873 = vmatpush2.bf16.msra.mxu0 0
  %874 = vmatprep.subr.bf16.mxu0 0
  %875 = vmatpush2.bf16.msra.mxu0 0
  %876 = vmatprep.subr.bf16.mxu0 0
  %877 = vmatpush2.bf16.msra.mxu0 0
  %878 = vmatprep.mubr.bf16.mxu0 0
  %879 = vmatmul.mubr.bf16.gmra.mxu0 %v844
  %v880 = vpop.f32.mrf.mxu0
  %v881 = vadd.f32 %v48, %v880
  %v882 = vpop.f32.mrf.mxu0
  %v883 = vpop.f32.mrf.mxu0
  %v884 = vpop.f32.mrf.mxu0
  %885 = vdwg.mxu0
  %v886 = vtanh.pop %v881
  %v887 = vpack.c.bf16 %v886, %v886
  %v889 = vsel %vm132, %v887, 0
  %891 = vmatprep.subr.bf16.mxu0 0
  %892 = vmatpush1.bf16.msra.mxu0 0
  %893 = vmatprep.subr.bf16.mxu0 0
  %894 = vmatpush1.bf16.msra.mxu0 0
  %895 = vmatprep.subr.bf16.mxu0 0
  %896 = vmatpush1.bf16.msra.mxu0 0
  %897 = vmatprep.subr.bf16.mxu0 0
  %898 = vmatpush1.bf16.msra.mxu0 0
  %899 = vmatprep.subr.bf16.mxu0 0
  %900 = vmatpush1.bf16.msra.mxu0 0
  %901 = vmatprep.subr.bf16.mxu0 0
  %902 = vmatpush1.bf16.msra.mxu0 0
  %903 = vmatprep.subr.bf16.mxu0 0
  %904 = vmatpush1.bf16.msra.mxu0 %v214
  %905 = vmatprep.subr.bf16.mxu0 0
  %906 = vmatpush1.bf16.msra.mxu0 %v213
  %907 = vmatprep.subr.bf16.mxu0 0
  %908 = vmatpush2.bf16.msra.mxu0 0
  %909 = vmatprep.subr.bf16.mxu0 0
  %910 = vmatpush2.bf16.msra.mxu0 0
  %911 = vmatprep.subr.bf16.mxu0 0
  %912 = vmatpush2.bf16.msra.mxu0 0
  %913 = vmatprep.subr.bf16.mxu0 0
  %914 = vmatpush2.bf16.msra.mxu0 0
  %915 = vmatprep.subr.bf16.mxu0 0
  %916 = vmatpush2.bf16.msra.mxu0 0
  %917 = vmatprep.subr.bf16.mxu0 0
  %918 = vmatpush2.bf16.msra.mxu0 0
  %919 = vmatprep.subr.bf16.mxu0 0
  %920 = vmatpush2.bf16.msra.mxu0 0
  %921 = vmatprep.subr.bf16.mxu0 0
  %922 = vmatpush2.bf16.msra.mxu0 0
  %923 = vmatprep.mubr.bf16.mxu0 0
  %924 = vmatmul.mubr.bf16.gmra.mxu0 %v889
  %v925 = vpop.f32.mrf.mxu0
  %v926 = vadd.f32 %v56, %v925
  %v927 = vpop.f32.mrf.mxu0
  %v928 = vpop.f32.mrf.mxu0
  %v929 = vpop.f32.mrf.mxu0
  %930 = vdwg.mxu0
  %v931 = vadd.f32 %v926, %v61
  %v932 = vsel %vm63, %v931, -inf
  %933 = vmax.xlane.f32.xlu0 %v932
  %v934 = vpop.xlane.xlu0 %933
  %v935 = vsub.f32 %v931, %v934
  %v936 = vmul.f32 %v935, 1.442695
  %v937 = vpow.pop %v936
  %v938 = vsel %vm63, %v937, 0.0
  %939 = vadd.xlane.f32.xlu0 %v938
  %v940 = vpop.xlane.xlu0 %939
  %v941 = vrcp.pop %v940
  %v942 = vmul.f32 %v937, %v941
  %v943 = vadd.f32 %v926, %v787
  %v944 = vsel %vm60, %v942, %v943
  %946 = vrot.lane.b32.xlu0 %v886, 12
  %v947 = vpop.permute.xlu0 %946
  %v949 = vsel %vm63, %v944, %v947
  %s950 = scalar_lea.vmem %s3, 32
  %951 = vst.msk [vmem:[%s950] sm:$0xff] %vm83, %v949
  %s952 = scalar_lea.vmem %s0, 40
  %v953 = vld [vmem:[%s952] sm:$0xff]
  %vm954 = vcmp.ne.f32.partialorder %v953, %v953
  %v955 = vsel %vm954, %v944, %v953
  %957 = vrot.lane.b32.xlu0 %v837, 12
  %v958 = vpop.permute.xlu0 %957
  %v960 = vsel %vm63, %v955, %v958
  %v961 = vpack.c.bf16 %v960, %v960
  %v963 = vsel %vm83, %v961, 0
  %965 = vmatprep.subr.bf16.mxu0 0
  %966 = vmatpush1.bf16.msra.mxu0 0
  %967 = vmatprep.subr.bf16.mxu0 0
  %968 = vmatpush1.bf16.msra.mxu0 0
  %969 = vmatprep.subr.bf16.mxu0 0
  %970 = vmatpush1.bf16.msra.mxu0 0
  %971 = vmatprep.subr.bf16.mxu0 0
  %972 = vmatpush1.bf16.msra.mxu0 0
  %973 = vmatprep.subr.bf16.mxu0 0
  %974 = vmatpush1.bf16.msra.mxu0 0
  %975 = vmatprep.subr.bf16.mxu0 0
  %976 = vmatpush1.bf16.msra.mxu0 %v89
  %977 = vmatprep.subr.bf16.mxu0 0
  %978 = vmatpush1.bf16.msra.mxu0 %v79
  %979 = vmatprep.subr.bf16.mxu0 0
  %980 = vmatpush1.bf16.msra.mxu0 %v78
  %981 = vmatprep.subr.bf16.mxu0 0
  %982 = vmatpush2.bf16.msra.mxu0 0
  %983 = vmatprep.subr.bf16.mxu0 0
  %984 = vmatpush2.bf16.msra.mxu0 0
  %985 = vmatprep.subr.bf16.mxu0 0
  %986 = vmatpush2.bf16.msra.mxu0 0
  %987 = vmatprep.subr.bf16.mxu0 0
  %988 = vmatpush2.bf16.msra.mxu0 0
  %989 = vmatprep.subr.bf16.mxu0 0
  %990 = vmatpush2.bf16.msra.mxu0 0
  %991 = vmatprep.subr.bf16.mxu0 0
  %992 = vmatpush2.bf16.msra.mxu0 0
  %993 = vmatprep.subr.bf16.mxu0 0
  %994 = vmatpush2.bf16.msra.mxu0 0
  %995 = vmatprep.subr.bf16.mxu0 0
  %996 = vmatpush2.bf16.msra.mxu0 0
  %997 = vmatprep.mubr.bf16.mxu0 0
  %998 = vmatmul.mubr.bf16.gmra.mxu0 %v963
  %v999 = vpop.f32.mrf.mxu0
  %v1000 = vadd.f32 %v40, %v999
  %v1001 = vpop.f32.mrf.mxu0
  %v1002 = vpop.f32.mrf.mxu0
  %v1003 = vpop.f32.mrf.mxu0
  %1004 = vdwg.mxu0
  %v1005 = vtanh.pop %v1000
  %1006 = vrot.lane.b32.xlu0 %v886, 32
  %v1007 = vpop.permute.xlu0 %1006
  %v1009 = vsel %vm132, %v1005, %v1007
  %v1010 = vpack.c.bf16 %v1009, %v1009
  %v1012 = vsel %vm159, %v1010, 0
  %1014 = vmatprep.subr.bf16.mxu0 0
  %1015 = vmatpush1.bf16.msra.mxu0 0
  %1016 = vmatprep.subr.bf16.mxu0 0
  %1017 = vmatpush1.bf16.msra.mxu0 0
  %1018 = vmatprep.subr.bf16.mxu0 0
  %1019 = vmatpush1.bf16.msra.mxu0 0
  %1020 = vmatprep.subr.bf16.mxu0 0
  %1021 = vmatpush1.bf16.msra.mxu0 0
  %1022 = vmatprep.subr.bf16.mxu0 0
  %1023 = vmatpush1.bf16.msra.mxu0 %v154
  %1024 = vmatprep.subr.bf16.mxu0 0
  %1025 = vmatpush1.bf16.msra.mxu0 %v153
  %1026 = vmatprep.subr.bf16.mxu0 0
  %1027 = vmatpush1.bf16.msra.mxu0 %v152
  %1028 = vmatprep.subr.bf16.mxu0 0
  %1029 = vmatpush1.bf16.msra.mxu0 %v151
  %1030 = vmatprep.subr.bf16.mxu0 0
  %1031 = vmatpush2.bf16.msra.mxu0 0
  %1032 = vmatprep.subr.bf16.mxu0 0
  %1033 = vmatpush2.bf16.msra.mxu0 0
  %1034 = vmatprep.subr.bf16.mxu0 0
  %1035 = vmatpush2.bf16.msra.mxu0 0
  %1036 = vmatprep.subr.bf16.mxu0 0
  %1037 = vmatpush2.bf16.msra.mxu0 0
  %1038 = vmatprep.subr.bf16.mxu0 0
  %1039 = vmatpush2.bf16.msra.mxu0 0
  %1040 = vmatprep.subr.bf16.mxu0 0
  %1041 = vmatpush2.bf16.msra.mxu0 0
  %1042 = vmatprep.subr.bf16.mxu0 0
  %1043 = vmatpush2.bf16.msra.mxu0 0
  %1044 = vmatprep.subr.bf16.mxu0 0
  %1045 = vmatpush2.bf16.msra.mxu0 0
  %1046 = vmatprep.mubr.bf16.mxu0 0
  %1047 = vmatmul.mubr.bf16.gmra.mxu0 %v1012
  %v1048 = vpop.f32.mrf.mxu0
  %v1049 = vadd.f32 %v48, %v1048
  %v1050 = vpop.f32.mrf.mxu0
  %v1051 = vpop.f32.mrf.mxu0
  %v1052 = vpop.f32.mrf.mxu0
  %1053 = vdwg.mxu0
  %v1054 = vtanh.pop %v1049
  %v1055 = vpack.c.bf16 %v1054, %v1054
  %v1057 = vsel %vm132, %v1055, 0
  %1059 = vmatprep.subr.bf16.mxu0 0
  %1060 = vmatpush1.bf16.msra.mxu0 0
  %1061 = vmatprep.subr.bf16.mxu0 0
  %1062 = vmatpush1.bf16.msra.mxu0 0
  %1063 = vmatprep.subr.bf16.mxu0 0
  %1064 = vmatpush1.bf16.msra.mxu0 0
  %1065 = vmatprep.subr.bf16.mxu0 0
  %1066 = vmatpush1.bf16.msra.mxu0 0
  %1067 = vmatprep.subr.bf16.mxu0 0
  %1068 = vmatpush1.bf16.msra.mxu0 0
  %1069 = vmatprep.subr.bf16.mxu0 0
  %1070 = vmatpush1.bf16.msra.mxu0 0
  %1071 = vmatprep.subr.bf16.mxu0 0
  %1072 = vmatpush1.bf16.msra.mxu0 %v214
  %1073 = vmatprep.subr.bf16.mxu0 0
  %1074 = vmatpush1.bf16.msra.mxu0 %v213
  %1075 = vmatprep.subr.bf16.mxu0 0
  %1076 = vmatpush2.bf16.msra.mxu0 0
  %1077 = vmatprep.subr.bf16.mxu0 0
  %1078 = vmatpush2.bf16.msra.mxu0 0
  %1079 = vmatprep.subr.bf16.mxu0 0
  %1080 = vmatpush2.bf16.msra.mxu0 0
  %1081 = vmatprep.subr.bf16.mxu0 0
  %1082 = vmatpush2.bf16.msra.mxu0 0
  %1083 = vmatprep.subr.bf16.mxu0 0
  %1084 = vmatpush2.bf16.msra.mxu0 0
  %1085 = vmatprep.subr.bf16.mxu0 0
  %1086 = vmatpush2.bf16.msra.mxu0 0
  %1087 = vmatprep.subr.bf16.mxu0 0
  %1088 = vmatpush2.bf16.msra.mxu0 0
  %1089 = vmatprep.subr.bf16.mxu0 0
  %1090 = vmatpush2.bf16.msra.mxu0 0
  %1091 = vmatprep.mubr.bf16.mxu0 0
  %1092 = vmatmul.mubr.bf16.gmra.mxu0 %v1057
  %v1093 = vpop.f32.mrf.mxu0
  %v1094 = vadd.f32 %v56, %v1093
  %v1095 = vpop.f32.mrf.mxu0
  %v1096 = vpop.f32.mrf.mxu0
  %v1097 = vpop.f32.mrf.mxu0
  %1098 = vdwg.mxu0
  %v1099 = vadd.f32 %v1094, %v61
  %v1100 = vsel %vm63, %v1099, -inf
  %1101 = vmax.xlane.f32.xlu0 %v1100
  %v1102 = vpop.xlane.xlu0 %1101
  %v1103 = vsub.f32 %v1099, %v1102
  %v1104 = vmul.f32 %v1103, 1.442695
  %v1105 = vpow.pop %v1104
  %v1106 = vsel %vm63, %v1105, 0.0
  %1107 = vadd.xlane.f32.xlu0 %v1106
  %v1108 = vpop.xlane.xlu0 %1107
  %v1109 = vrcp.pop %v1108
  %v1110 = vmul.f32 %v1105, %v1109
  %v1111 = vadd.f32 %v1094, %v955
  %v1112 = vsel %vm60, %v1110, %v1111
  %1114 = vrot.lane.b32.xlu0 %v1054, 12
  %v1115 = vpop.permute.xlu0 %1114
  %v1117 = vsel %vm63, %v1112, %v1115
  %s1118 = scalar_lea.vmem %s3, 40
  %1119 = vst.msk [vmem:[%s1118] sm:$0xff] %vm83, %v1117
  %s1120 = scalar_lea.vmem %s0, 48
  %v1121 = vld [vmem:[%s1120] sm:$0xff]
  %vm1122 = vcmp.ne.f32.partialorder %v1121, %v1121
  %v1123 = vsel %vm1122, %v1112, %v1121
  %1125 = vrot.lane.b32.xlu0 %v1005, 12
  %v1126 = vpop.permute.xlu0 %1125
  %v1128 = vsel %vm63, %v1123, %v1126
  %v1129 = vpack.c.bf16 %v1128, %v1128
  %v1131 = vsel %vm83, %v1129, 0
  %1133 = vmatprep.subr.bf16.mxu0 0
  %1134 = vmatpush1.bf16.msra.mxu0 0
  %1135 = vmatprep.subr.bf16.mxu0 0
  %1136 = vmatpush1.bf16.msra.mxu0 0
  %1137 = vmatprep.subr.bf16.mxu0 0
  %1138 = vmatpush1.bf16.msra.mxu0 0
  %1139 = vmatprep.subr.bf16.mxu0 0
  %1140 = vmatpush1.bf16.msra.mxu0 0
  %1141 = vmatprep.subr.bf16.mxu0 0
  %1142 = vmatpush1.bf16.msra.mxu0 0
  %1143 = vmatprep.subr.bf16.mxu0 0
  %1144 = vmatpush1.bf16.msra.mxu0 %v89
  %1145 = vmatprep.subr.bf16.mxu0 0
  %1146 = vmatpush1.bf16.msra.mxu0 %v79
  %1147 = vmatprep.subr.bf16.mxu0 0
  %1148 = vmatpush1.bf16.msra.mxu0 %v78
  %1149 = vmatprep.subr.bf16.mxu0 0
  %1150 = vmatpush2.bf16.msra.mxu0 0
  %1151 = vmatprep.subr.bf16.mxu0 0
  %1152 = vmatpush2.bf16.msra.mxu0 0
  %1153 = vmatprep.subr.bf16.mxu0 0
  %1154 = vmatpush2.bf16.msra.mxu0 0
  %1155 = vmatprep.subr.bf16.mxu0 0
  %1156 = vmatpush2.bf16.msra.mxu0 0
  %1157 = vmatprep.subr.bf16.mxu0 0
  %1158 = vmatpush2.bf16.msra.mxu0 0
  %1159 = vmatprep.subr.bf16.mxu0 0
  %1160 = vmatpush2.bf16.msra.mxu0 0
  %1161 = vmatprep.subr.bf16.mxu0 0
  %1162 = vmatpush2.bf16.msra.mxu0 0
  %1163 = vmatprep.subr.bf16.mxu0 0
  %1164 = vmatpush2.bf16.msra.mxu0 0
  %1165 = vmatprep.mubr.bf16.mxu0 0
  %1166 = vmatmul.mubr.bf16.gmra.mxu0 %v1131
  %v1167 = vpop.f32.mrf.mxu0
  %v1168 = vadd.f32 %v40, %v1167
  %v1169 = vpop.f32.mrf.mxu0
  %v1170 = vpop.f32.mrf.mxu0
  %v1171 = vpop.f32.mrf.mxu0
  %1172 = vdwg.mxu0
  %v1173 = vtanh.pop %v1168
  %1174 = vrot.lane.b32.xlu0 %v1054, 32
  %v1175 = vpop.permute.xlu0 %1174
  %v1177 = vsel %vm132, %v1173, %v1175
  %v1178 = vpack.c.bf16 %v1177, %v1177
  %v1180 = vsel %vm159, %v1178, 0
  %1182 = vmatprep.subr.bf16.mxu0 0
  %1183 = vmatpush1.bf16.msra.mxu0 0
  %1184 = vmatprep.subr.bf16.mxu0 0
  %1185 = vmatpush1.bf16.msra.mxu0 0
  %1186 = vmatprep.subr.bf16.mxu0 0
  %1187 = vmatpush1.bf16.msra.mxu0 0
  %1188 = vmatprep.subr.bf16.mxu0 0
  %1189 = vmatpush1.bf16.msra.mxu0 0
  %1190 = vmatprep.subr.bf16.mxu0 0
  %1191 = vmatpush1.bf16.msra.mxu0 %v154
  %1192 = vmatprep.subr.bf16.mxu0 0
  %1193 = vmatpush1.bf16.msra.mxu0 %v153
  %1194 = vmatprep.subr.bf16.mxu0 0
  %1195 = vmatpush1.bf16.msra.mxu0 %v152
  %1196 = vmatprep.subr.bf16.mxu0 0
  %1197 = vmatpush1.bf16.msra.mxu0 %v151
  %1198 = vmatprep.subr.bf16.mxu0 0
  %1199 = vmatpush2.bf16.msra.mxu0 0
  %1200 = vmatprep.subr.bf16.mxu0 0
  %1201 = vmatpush2.bf16.msra.mxu0 0
  %1202 = vmatprep.subr.bf16.mxu0 0
  %1203 = vmatpush2.bf16.msra.mxu0 0
  %1204 = vmatprep.subr.bf16.mxu0 0
  %1205 = vmatpush2.bf16.msra.mxu0 0
  %1206 = vmatprep.subr.bf16.mxu0 0
  %1207 = vmatpush2.bf16.msra.mxu0 0
  %1208 = vmatprep.subr.bf16.mxu0 0
  %1209 = vmatpush2.bf16.msra.mxu0 0
  %1210 = vmatprep.subr.bf16.mxu0 0
  %1211 = vmatpush2.bf16.msra.mxu0 0
  %1212 = vmatprep.subr.bf16.mxu0 0
  %1213 = vmatpush2.bf16.msra.mxu0 0
  %1214 = vmatprep.mubr.bf16.mxu0 0
  %1215 = vmatmul.mubr.bf16.gmra.mxu0 %v1180
  %v1216 = vpop.f32.mrf.mxu0
  %v1217 = vadd.f32 %v48, %v1216
  %v1218 = vpop.f32.mrf.mxu0
  %v1219 = vpop.f32.mrf.mxu0
  %v1220 = vpop.f32.mrf.mxu0
  %1221 = vdwg.mxu0
  %v1222 = vtanh.pop %v1217
  %v1223 = vpack.c.bf16 %v1222, %v1222
  %v1225 = vsel %vm132, %v1223, 0
  %1227 = vmatprep.subr.bf16.mxu0 0
  %1228 = vmatpush1.bf16.msra.mxu0 0
  %1229 = vmatprep.subr.bf16.mxu0 0
  %1230 = vmatpush1.bf16.msra.mxu0 0
  %1231 = vmatprep.subr.bf16.mxu0 0
  %1232 = vmatpush1.bf16.msra.mxu0 0
  %1233 = vmatprep.subr.bf16.mxu0 0
  %1234 = vmatpush1.bf16.msra.mxu0 0
  %1235 = vmatprep.subr.bf16.mxu0 0
  %1236 = vmatpush1.bf16.msra.mxu0 0
  %1237 = vmatprep.subr.bf16.mxu0 0
  %1238 = vmatpush1.bf16.msra.mxu0 0
  %1239 = vmatprep.subr.bf16.mxu0 0
  %1240 = vmatpush1.bf16.msra.mxu0 %v214
  %1241 = vmatprep.subr.bf16.mxu0 0
  %1242 = vmatpush1.bf16.msra.mxu0 %v213
  %1243 = vmatprep.subr.bf16.mxu0 0
  %1244 = vmatpush2.bf16.msra.mxu0 0
  %1245 = vmatprep.subr.bf16.mxu0 0
  %1246 = vmatpush2.bf16.msra.mxu0 0
  %1247 = vmatprep.subr.bf16.mxu0 0
  %1248 = vmatpush2.bf16.msra.mxu0 0
  %1249 = vmatprep.subr.bf16.mxu0 0
  %1250 = vmatpush2.bf16.msra.mxu0 0
  %1251 = vmatprep.subr.bf16.mxu0 0
  %1252 = vmatpush2.bf16.msra.mxu0 0
  %1253 = vmatprep.subr.bf16.mxu0 0
  %1254 = vmatpush2.bf16.msra.mxu0 0
  %1255 = vmatprep.subr.bf16.mxu0 0
  %1256 = vmatpush2.bf16.msra.mxu0 0
  %1257 = vmatprep.subr.bf16.mxu0 0
  %1258 = vmatpush2.bf16.msra.mxu0 0
  %1259 = vmatprep.mubr.bf16.mxu0 0
  %1260 = vmatmul.mubr.bf16.gmra.mxu0 %v1225
  %v1261 = vpop.f32.mrf.mxu0
  %v1262 = vadd.f32 %v56, %v1261
  %v1263 = vpop.f32.mrf.mxu0
  %v1264 = vpop.f32.mrf.mxu0
  %v1265 = vpop.f32.mrf.mxu0
  %1266 = vdwg.mxu0
  %v1267 = vadd.f32 %v1262, %v61
  %v1268 = vsel %vm63, %v1267, -inf
  %1269 = vmax.xlane.f32.xlu0 %v1268
  %v1270 = vpop.xlane.xlu0 %1269
  %v1271 = vsub.f32 %v1267, %v1270
  %v1272 = vmul.f32 %v1271, 1.442695
  %v1273 = vpow.pop %v1272
  %v1274 = vsel %vm63, %v1273, 0.0
  %1275 = vadd.xlane.f32.xlu0 %v1274
  %v1276 = vpop.xlane.xlu0 %1275
  %v1277 = vrcp.pop %v1276
  %v1278 = vmul.f32 %v1273, %v1277
  %v1279 = vadd.f32 %v1262, %v1123
  %v1280 = vsel %vm60, %v1278, %v1279
  %1282 = vrot.lane.b32.xlu0 %v1222, 12
  %v1283 = vpop.permute.xlu0 %1282
  %v1285 = vsel %vm63, %v1280, %v1283
  %s1286 = scalar_lea.vmem %s3, 48
  %1287 = vst.msk [vmem:[%s1286] sm:$0xff] %vm83, %v1285
  // Predicated region
  $region14: #{rnn_forward_all.1} parent=0 // pred_check
    _
  $region15: #{rnn_forward_all.1} parent=0 // pred_check_branch
    %1289 = sbr.rel (0) target = $region17
  $region16: #{rnn_forward_all.1} parent=0 // pred_region
    _
  $region17: #{rnn_forward_all.1} parent=0 // pred_fallthru
    _
  // Predicated region
  $region18: #{rnn_forward_all.1} parent=0 // pred_check
    _
  $region19: #{rnn_forward_all.1} parent=0 // pred_check_branch
    %1291 = sbr.rel (0) target = $region21
  $region20: #{rnn_forward_all.1} parent=0 // pred_region
    _
  $region21: #{rnn_forward_all.1} parent=0 // pred_fallthru
    _

</llo_original>
